<compile_context>
chip_gen: v6e
topology: v6e:2x2x1
jax: 0.10.0
libtpu: 0.0.40
codegen_flags: <defaults>
</compile_context>

<pallas_src>
import math

import jax
import jax.numpy as jnp
from jax import lax
from jax.experimental import pallas as pl
from jax.experimental.pallas import tpu as pltpu

IN_DIM = 1024
HID_DIM = 512
OUT_DIM = 1024

_INV_SQRT2 = 1.0 / math.sqrt(2.0)


def mlp3_kernel(x_ref, w1_ref, b1_ref, w2_ref, b2_ref, o_ref):
    # ---- Linear 1: (tm, 1024) @ (1024, 512) + (1, 512), f32 accumulation ----
    h = jnp.dot(x_ref[...], w1_ref[...], preferred_element_type=jnp.float32)
    h = h + b1_ref[...]

    # ---- GELU (exact, erf-based — matches torch.nn.GELU() default) ----
    h = 0.5 * h * (1.0 + lax.erf(h * _INV_SQRT2))

    # ---- Linear 2: (tm, 512) @ (512, 1024) + (1, 1024) ----
    y = jnp.dot(h, w2_ref[...], preferred_element_type=jnp.float32)
    y = y + b2_ref[...]

    o_ref[...] = y.astype(o_ref.dtype)


def _round_up(x, m):
    return ((x + m - 1) // m) * m


def _pick_tm(batch):
    """Pick a batch tile: big enough to feed the MXU, >=2 grid steps for v7x."""
    if batch >= 512:
        return 256                       # 256-row tiles, many parallel steps
    if batch >= 16:
        # ~half the batch per tile (>= 2 grid steps so both v7x TCs work),
        # rounded up to a sublane multiple, capped at 256.
        return min(256, _round_up(pl.cdiv(batch, 2), 8))
    return 8


def _mlp3_pallas(x, w1, b1_2d, w2, b2_2d, tm):
    Bp = x.shape[0]
    grid = (Bp // tm,)

    flops = 2 * Bp * (IN_DIM * HID_DIM + HID_DIM * OUT_DIM)
    bytes_accessed = (
        Bp * IN_DIM * 4                       # x
        + Bp * OUT_DIM * 4                    # out
        + (IN_DIM * HID_DIM + HID_DIM * OUT_DIM) * 4   # weights (resident)
        + (HID_DIM + OUT_DIM) * 4             # biases
    )

    return pl.pallas_call(
        mlp3_kernel,
        out_shape=jax.ShapeDtypeStruct((Bp, OUT_DIM), x.dtype),
        grid_spec=pltpu.PrefetchScalarGridSpec(
            num_scalar_prefetch=0,
            grid=grid,
            in_specs=[
                pl.BlockSpec((tm, IN_DIM), lambda i: (i, 0)),        # x tile
                pl.BlockSpec((IN_DIM, HID_DIM), lambda i: (0, 0)),   # W1 (resident)
                pl.BlockSpec((1, HID_DIM), lambda i: (0, 0)),        # b1
                pl.BlockSpec((HID_DIM, OUT_DIM), lambda i: (0, 0)),  # W2 (resident)
                pl.BlockSpec((1, OUT_DIM), lambda i: (0, 0)),        # b2
            ],
            out_specs=pl.BlockSpec((tm, OUT_DIM), lambda i: (i, 0)),
        ),
        compiler_params=pltpu.CompilerParams(
            dimension_semantics=("parallel",),
        ),
        cost_estimate=pl.CostEstimate(
            flops=flops,
            transcendentals=Bp * HID_DIM,     # one erf per hidden activation
            bytes_accessed=bytes_accessed,
        ),
    )(x, w1, b1_2d, w2, b2_2d)


def mlp3_forward(x, w1, b1, w2, b2, *, tm=None):
    """x: (B, 1024) f32.  w1: (1024, 512), b1: (512,), w2: (512, 1024), b2: (1024,)."""
    B = x.shape[0]
    if tm is None:
        tm = _pick_tm(B)
    tm = max(8, _round_up(min(tm, max(B, 8)), 8))

    # Pad the batch up to a multiple of the tile (padded rows are sliced off).
    Bp = _round_up(B, tm)
    xp = x if Bp == B else jnp.pad(x, ((0, Bp - B), (0, 0)))

    b1_2d = b1.reshape(1, HID_DIM)
    b2_2d = b2.reshape(1, OUT_DIM)

    out = _mlp3_pallas(xp, w1, b1_2d, w2, b2_2d, tm)
    return out if Bp == B else out[:B]


def reference_forward(x, w1, b1, w2, b2):
    h = x @ w1 + b1
    h = jax.nn.gelu(h, approximate=False)
    return h @ w2 + b2


if __name__ == "__main__":
    key = jax.random.PRNGKey(0)
    kx, k1, kb1, k2, kb2 = jax.random.split(key, 5)

    # Deterministic parameter init (matches torch Linear init ranges, U(+-1/sqrt(fan_in))).
    bound1 = 1.0 / math.sqrt(IN_DIM)
    bound2 = 1.0 / math.sqrt(HID_DIM)
    w1 = jax.random.uniform(k1, (IN_DIM, HID_DIM), jnp.float32, -bound1, bound1)
    b1 = jax.random.uniform(kb1, (HID_DIM,), jnp.float32, -bound1, bound1)
    w2 = jax.random.uniform(k2, (HID_DIM, OUT_DIM), jnp.float32, -bound2, bound2)
    b2 = jax.random.uniform(kb2, (OUT_DIM,), jnp.float32, -bound2, bound2)

    # B=16 -> two 8-row tiles (exercises the >=2 grid-step / megacore path);
    # B=13 -> ragged batch (exercises the padding path).
    for B in (16, 13):
        x = jax.random.normal(kx, (B, IN_DIM), dtype=jnp.float32)
        out = jax.block_until_ready(mlp3_forward(x, w1, b1, w2, b2))
        ref = reference_forward(x, w1, b1, w2, b2)
        assert out.shape == (B, OUT_DIM)
        assert jnp.allclose(out, ref, atol=1e-4, rtol=1e-4), "mismatch vs JAX reference"

    print("KERNEL_OK")
</pallas_src>

<mosaic_0001>
module attributes {stable_mosaic.version = 11 : i64} {
  func.func @mlp3_kernel(%arg0: i32, %arg1: memref<8x1024xf32, #tpu.memory_space<vmem>>, %arg2: memref<1024x512xf32, #tpu.memory_space<vmem>>, %arg3: memref<1x512xf32, #tpu.memory_space<vmem>>, %arg4: memref<512x1024xf32, #tpu.memory_space<vmem>>, %arg5: memref<1x1024xf32, #tpu.memory_space<vmem>>, %arg6: memref<8x1024xf32, #tpu.memory_space<vmem>>) attributes {dimension_semantics = [#tpu.dimension_semantics<parallel>], iteration_bounds = array<i64: 2>, scalar_prefetch = 0 : i64, scratch_operands = 0 : i64, tpu.core_type = #tpu.core_type<tc>, window_params = [{transform_indices = @transform_0, window_bounds = array<i64: 8, 1024>}, {pipeline_mode = #tpu.pipeline_mode<synchronous>, transform_indices = @transform_1, window_bounds = array<i64: 1024, 512>}, {pipeline_mode = #tpu.pipeline_mode<synchronous>, transform_indices = @transform_2, window_bounds = array<i64: 1, 512>}, {pipeline_mode = #tpu.pipeline_mode<synchronous>, transform_indices = @transform_3, window_bounds = array<i64: 512, 1024>}, {pipeline_mode = #tpu.pipeline_mode<synchronous>, transform_indices = @transform_4, window_bounds = array<i64: 1, 1024>}, {transform_indices = @transform_5, window_bounds = array<i64: 8, 1024>}]} {
    %c0 = arith.constant 0 : index
    %c0_0 = arith.constant 0 : index
    %0 = vector.load %arg1[%c0, %c0_0] : memref<8x1024xf32, #tpu.memory_space<vmem>>, vector<8x1024xf32>
    %c0_1 = arith.constant 0 : index
    %c0_2 = arith.constant 0 : index
    %1 = vector.load %arg2[%c0_1, %c0_2] : memref<1024x512xf32, #tpu.memory_space<vmem>>, vector<1024x512xf32>
    %cst = arith.constant dense<0.000000e+00> : vector<8x512xf32>
    %2 = tpu.matmul %0, %1, %cst {dimension_numbers = #tpu.dot_dimension_numbers<[1], [0], [0], [1], [0, 0, 1, 1], [], []>} : vector<8x1024xf32>, vector<1024x512xf32>, vector<8x512xf32> -> vector<8x512xf32>
    %c0_3 = arith.constant 0 : index
    %c0_4 = arith.constant 0 : index
    %3 = vector.load %arg3[%c0_3, %c0_4] : memref<1x512xf32, #tpu.memory_space<vmem>>, vector<1x512xf32>
    %4 = vector.broadcast %3 : vector<1x512xf32> to vector<8x512xf32>
    %5 = arith.addf %2, %4 : vector<8x512xf32>
    %cst_5 = arith.constant 5.000000e-01 : f32
    %6 = vector.broadcast %cst_5 : f32 to vector<8x512xf32>
    %7 = arith.mulf %6, %5 : vector<8x512xf32>
    %cst_6 = arith.constant 0.707106769 : f32
    %8 = vector.broadcast %cst_6 : f32 to vector<8x512xf32>
    %9 = arith.mulf %5, %8 : vector<8x512xf32>
    %10 = math.erf %9 : vector<8x512xf32>
    %cst_7 = arith.constant 1.000000e+00 : f32
    %11 = vector.broadcast %cst_7 : f32 to vector<8x512xf32>
    %12 = arith.addf %11, %10 : vector<8x512xf32>
    %13 = arith.mulf %7, %12 : vector<8x512xf32>
    %c0_8 = arith.constant 0 : index
    %c0_9 = arith.constant 0 : index
    %14 = vector.load %arg4[%c0_8, %c0_9] : memref<512x1024xf32, #tpu.memory_space<vmem>>, vector<512x1024xf32>
    %cst_10 = arith.constant dense<0.000000e+00> : vector<8x1024xf32>
    %15 = tpu.matmul %13, %14, %cst_10 {dimension_numbers = #tpu.dot_dimension_numbers<[1], [0], [0], [1], [0, 0, 1, 1], [], []>} : vector<8x512xf32>, vector<512x1024xf32>, vector<8x1024xf32> -> vector<8x1024xf32>
    %c0_11 = arith.constant 0 : index
    %c0_12 = arith.constant 0 : index
    %16 = vector.load %arg5[%c0_11, %c0_12] : memref<1x1024xf32, #tpu.memory_space<vmem>>, vector<1x1024xf32>
    %17 = vector.broadcast %16 : vector<1x1024xf32> to vector<8x1024xf32>
    %18 = arith.addf %15, %17 : vector<8x1024xf32>
    %c0_13 = arith.constant 0 : index
    %c0_14 = arith.constant 0 : index
    %19 = vector.load %arg6[%c0_13, %c0_14] : memref<8x1024xf32, #tpu.memory_space<vmem>>, vector<8x1024xf32>
    tpu.vector_store %arg6[%c0_13, %c0_14], %18 {strides = array<i32>} : memref<8x1024xf32, #tpu.memory_space<vmem>>, vector<8x1024xf32>,
    return
  }
  func.func @transform_0(%arg0: i32) -> (i32, i32) {
    %c0_i32 = arith.constant 0 : i32
    %c0_i32_0 = arith.constant 0 : i32
    return %arg0, %c0_i32 : i32, i32
  }
  func.func @transform_1(%arg0: i32) -> (i32, i32) {
    %c0_i32 = arith.constant 0 : i32
    %c0_i32_0 = arith.constant 0 : i32
    %c0_i32_1 = arith.constant 0 : i32
    return %c0_i32, %c0_i32_0 : i32, i32
  }
  func.func @transform_2(%arg0: i32) -> (i32, i32) {
    %c0_i32 = arith.constant 0 : i32
    %c0_i32_0 = arith.constant 0 : i32
    %c0_i32_1 = arith.constant 0 : i32
    return %c0_i32, %c0_i32_0 : i32, i32
  }
  func.func @transform_3(%arg0: i32) -> (i32, i32) {
    %c0_i32 = arith.constant 0 : i32
    %c0_i32_0 = arith.constant 0 : i32
    %c0_i32_1 = arith.constant 0 : i32
    return %c0_i32, %c0_i32_0 : i32, i32
  }
  func.func @transform_4(%arg0: i32) -> (i32, i32) {
    %c0_i32 = arith.constant 0 : i32
    %c0_i32_0 = arith.constant 0 : i32
    %c0_i32_1 = arith.constant 0 : i32
    return %c0_i32, %c0_i32_0 : i32, i32
  }
  func.func @transform_5(%arg0: i32) -> (i32, i32) {
    %c0_i32 = arith.constant 0 : i32
    %c0_i32_0 = arith.constant 0 : i32
    return %arg0, %c0_i32 : i32, i32
  }
}

</mosaic_0001>

<llo_original>
// kernel: tpu_custom_call.1
$region0: #{tpu_custom_call.1}
  #allocation0 [shape = 'u32[]', space=smem, size = 0x4, offset = 0x4, fixed_abs, tag = 'smem constant byte address 0x4 - core index']
  #allocation1 [shape = 'u32[144,128]{1,0:T(1,128)}', space=vmem, size = 0x12000, scoped, tag = 'internal scratch']
  %s0 = inlined_call_operand.hbm [shape: f32[16,1024], index: 0, kind: input, shape index: {}]
  %s1 = inlined_call_operand.hbm [shape: f32[1024,512], index: 1, kind: input, shape index: {}]
  %s2 = inlined_call_operand.hbm [shape: f32[1,512], index: 2, kind: input, shape index: {}]
  %s3 = inlined_call_operand.hbm [shape: f32[512,1024], index: 3, kind: input, shape index: {}]
  %s4 = inlined_call_operand.hbm [shape: f32[1,1024], index: 4, kind: input, shape index: {}]
  %s5 = inlined_call_operand.hbm [shape: f32[16,1024], index: 5, kind: output, shape index: {}]
  %s6 = sld [smem:[#allocation0]]
  $region73: #{tpu_custom_call.1} parent=0
    _
  %s8 = ssub.s32 1, %s6
  %s9 = scalar_select 0, %s8, %s6
  $region1: #{tpu_custom_call.1} parent=0
    #allocation2 [shape = 'u8[65536]{0}', space=vmem, size = 0x10000, scoped, tag = 'input window, operand 0']
    #allocation3 [shape = 's32[2]{0}', space=sflag, size = 0x8, scoped, tag = 'scoped memory for tpu_custom_call.1']
    #allocation4 [shape = 's32[2]{0}', space=sflag, size = 0x8, scoped, tag = 'scoped memory for tpu_custom_call.1']
    #allocation5 [shape = 'u8[2097152]{0}', space=vmem, size = 0x200000, scoped, tag = 'input window, operand 1, single buffered']
    #allocation6 [shape = 's32[1]{0}', space=sflag, size = 0x4, scoped, tag = 'scoped memory for tpu_custom_call.1']
    #allocation7 [shape = 'u8[2048]{0}', space=vmem, size = 0x800, scoped, tag = 'input window, operand 2, single buffered']
    #allocation8 [shape = 'u8[2097152]{0}', space=vmem, size = 0x200000, scoped, tag = 'input window, operand 3, single buffered']
    #allocation9 [shape = 's32[1]{0}', space=sflag, size = 0x4, scoped, tag = 'scoped memory for tpu_custom_call.1']
    #allocation10 [shape = 'u8[4096]{0}', space=vmem, size = 0x1000, scoped, tag = 'input window, operand 4, single buffered']
    #allocation11 [shape = 'u8[65536]{0}', space=vmem, size = 0x10000, scoped, tag = 'output window, operand 0']
    %10 = vsyncpa [#allocation3], 0
    %s11 = scalar_lea.sflag [#allocation3], 1
    %12 = vsyncpa %s11, 0
    %13 = vsyncpa [#allocation6], 0
    %14 = vsyncpa [#allocation9], 0
    %15 = vsyncpa [#allocation4], 0
    %s16 = scalar_lea.sflag [#allocation4], 1
    %17 = vsyncpa %s16, 0
    loop: start=0, step=1, limit=4
    $region2: #{tpu_custom_call.1} parent=1 // loop_pre_header
      _
    $region3: #{tpu_custom_call.1} parent=1 // loop_header
      %s19 = sphi 0, %s23
      %p20 = scmp.ge.s32.totalorder %s19, 4
      %s29 = sphi 0, %s31
      %s32 = sphi 0, %s29
      %s33 = sphi 0, %s32
      %s49 = sphi 0, %s33
      %s53 = sphi 0, %s53
      %s55 = sphi 0, %s53
      %s56 = sphi 0, %s55
      %s70 = sphi 0, %s56
      %s74 = sphi 0, %s74
      %s76 = sphi 0, %s74
      %s77 = sphi 0, %s76
      %s91 = sphi 0, %s77
      %s95 = sphi 0, %s95
      %s97 = sphi 0, %s95
      %s98 = sphi 0, %s97
      %s112 = sphi 0, %s98
      %s116 = sphi 0, %s116
      %s118 = sphi 0, %s116
      %s119 = sphi 0, %s118
      %s133 = sphi 0, %s119
      %s139 = sphi 0, %s141
      %s142 = sphi 0, %s139
      %s143 = sphi 0, %s142
      %s159 = sphi 0, %s143
    $region4: #{tpu_custom_call.1} parent=1 // loop_header_branch
      %22 = sbr.rel (%p20) target = $region8
    $region5: #{tpu_custom_call.1} parent=1 // loop_body
      %s24 = ssub.s32 %s19, 1
      %s25 = ssub.s32 %s19, 2
      %s26 = sadd.s32 %s19, 1
      %s27 = ssub.s32 %s19, %s26
      %p28 = scmp.eq.s32.totalorder %s27, 0
      %s30 = sadd.s32 %s29, 1
      %s31 = scalar_select %p28, %s29, %s30
      %p34 = pneg %p28
      %p35 = scmp.eq.s32.totalorder %s19, 1
      %p36 = por %p34, %p35
      %p37 = scmp.ne.s32.totalorder %s29, %s32
      %p38 = scmp.eq.s32.totalorder %s19, 0
      %p39 = por %p37, %p38
      %p40 = scmp.ne.s32.totalorder %s29, %s32
      %p41 = scmp.eq.s32.totalorder %s24, 1
      %p42 = por %p40, %p41
      %p43 = scmp.ne.s32.totalorder %s32, %s33
      %p44 = scmp.eq.s32.totalorder %s24, 0
      %p45 = por %p43, %p44
      %p46 = scmp.ne.s32.totalorder %s32, %s33
      %p47 = scmp.eq.s32.totalorder %s25, 1
      %p48 = por %p46, %p47
      %p50 = scmp.ne.s32.totalorder %s33, %s49
      %p51 = scmp.eq.s32.totalorder %s25, 0
      %p52 = por %p50, %p51
      %s54 = sadd.s32 %s53, 1
      %p57 = scmp.eq.s32.totalorder %s19, 1
      %p58 = scmp.ne.s32.totalorder %s53, %s55
      %p59 = scmp.eq.s32.totalorder %s19, 0
      %p60 = por %p58, %p59
      %p61 = scmp.ne.s32.totalorder %s53, %s55
      %p62 = scmp.eq.s32.totalorder %s24, 1
      %p63 = por %p61, %p62
      %p64 = scmp.ne.s32.totalorder %s55, %s56
      %p65 = scmp.eq.s32.totalorder %s24, 0
      %p66 = por %p64, %p65
      %p67 = scmp.ne.s32.totalorder %s55, %s56
      %p68 = scmp.eq.s32.totalorder %s25, 1
      %p69 = por %p67, %p68
      %p71 = scmp.ne.s32.totalorder %s56, %s70
      %p72 = scmp.eq.s32.totalorder %s25, 0
      %p73 = por %p71, %p72
      %s75 = sadd.s32 %s74, 1
      %p78 = scmp.eq.s32.totalorder %s19, 1
      %p79 = scmp.ne.s32.totalorder %s74, %s76
      %p80 = scmp.eq.s32.totalorder %s19, 0
      %p81 = por %p79, %p80
      %p82 = scmp.ne.s32.totalorder %s74, %s76
      %p83 = scmp.eq.s32.totalorder %s24, 1
      %p84 = por %p82, %p83
      %p85 = scmp.ne.s32.totalorder %s76, %s77
      %p86 = scmp.eq.s32.totalorder %s24, 0
      %p87 = por %p85, %p86
      %p88 = scmp.ne.s32.totalorder %s76, %s77
      %p89 = scmp.eq.s32.totalorder %s25, 1
      %p90 = por %p88, %p89
      %p92 = scmp.ne.s32.totalorder %s77, %s91
      %p93 = scmp.eq.s32.totalorder %s25, 0
      %p94 = por %p92, %p93
      %s96 = sadd.s32 %s95, 1
      %p99 = scmp.eq.s32.totalorder %s19, 1
      %p100 = scmp.ne.s32.totalorder %s95, %s97
      %p101 = scmp.eq.s32.totalorder %s19, 0
      %p102 = por %p100, %p101
      %p103 = scmp.ne.s32.totalorder %s95, %s97
      %p104 = scmp.eq.s32.totalorder %s24, 1
      %p105 = por %p103, %p104
      %p106 = scmp.ne.s32.totalorder %s97, %s98
      %p107 = scmp.eq.s32.totalorder %s24, 0
      %p108 = por %p106, %p107
      %p109 = scmp.ne.s32.totalorder %s97, %s98
      %p110 = scmp.eq.s32.totalorder %s25, 1
      %p111 = por %p109, %p110
      %p113 = scmp.ne.s32.totalorder %s98, %s112
      %p114 = scmp.eq.s32.totalorder %s25, 0
      %p115 = por %p113, %p114
      %s117 = sadd.s32 %s116, 1
      %p120 = scmp.eq.s32.totalorder %s19, 1
      %p121 = scmp.ne.s32.totalorder %s116, %s118
      %p122 = scmp.eq.s32.totalorder %s19, 0
      %p123 = por %p121, %p122
      %p124 = scmp.ne.s32.totalorder %s116, %s118
      %p125 = scmp.eq.s32.totalorder %s24, 1
      %p126 = por %p124, %p125
      %p127 = scmp.ne.s32.totalorder %s118, %s119
      %p128 = scmp.eq.s32.totalorder %s24, 0
      %p129 = por %p127, %p128
      %p130 = scmp.ne.s32.totalorder %s118, %s119
      %p131 = scmp.eq.s32.totalorder %s25, 1
      %p132 = por %p130, %p131
      %p134 = scmp.ne.s32.totalorder %s119, %s133
      %p135 = scmp.eq.s32.totalorder %s25, 0
      %p136 = por %p134, %p135
      %s137 = ssub.s32 %s19, %s26
      %p138 = scmp.eq.s32.totalorder %s137, 0
      %s140 = sadd.s32 %s139, 1
      %s141 = scalar_select %p138, %s139, %s140
      %p144 = pneg %p138
      %p145 = scmp.eq.s32.totalorder %s19, 1
      %p146 = por %p144, %p145
      %p147 = scmp.ne.s32.totalorder %s139, %s142
      %p148 = scmp.eq.s32.totalorder %s19, 0
      %p149 = por %p147, %p148
      %p150 = scmp.ne.s32.totalorder %s139, %s142
      %p151 = scmp.eq.s32.totalorder %s24, 1
      %p152 = por %p150, %p151
      %p153 = scmp.ne.s32.totalorder %s142, %s143
      %p154 = scmp.eq.s32.totalorder %s24, 0
      %p155 = por %p153, %p154
      %p156 = scmp.ne.s32.totalorder %s142, %s143
      %p157 = scmp.eq.s32.totalorder %s25, 1
      %p158 = por %p156, %p157
      %p160 = scmp.ne.s32.totalorder %s143, %s159
      %p161 = scmp.eq.s32.totalorder %s25, 0
      %p162 = por %p160, %p161
      %p163 = scmp.le.s32.totalorder 1, %s19
      %p164 = scmp.lt.s32.totalorder %s19, 3
      %p165 = pnand %p163, %p164
      %p166 = pneg %p165
      // Predicated region
      $region9: #{tpu_custom_call.1} parent=5 // pred_check
        _
      $region10: #{tpu_custom_call.1} parent=5 // pred_check_branch
        %168 = sbr.rel (%p165) target = $region12
      $region11: #{tpu_custom_call.1} parent=5 // pred_region
        %s169 = ssub.s32 %s19, 1
        // Predicated region
        $region13: #{tpu_custom_call.1} parent=11 // pred_check
          %p170 = pneg %p66
        $region14: #{tpu_custom_call.1} parent=11 // pred_check_branch
          %172 = sbr.rel (%p170) target = $region16
        $region15: #{tpu_custom_call.1} parent=11 // pred_region
          %s174 = ssub.s32 65536, 65536
          %175 = vsyncadd [#allocation6], %s174
          %s176 = sshll.u32 [#allocation5], 4
          %s177 = int_to_ptr.vmem [resolvable:$true] %s176
          %182 = dma.hbm_to_vmem [thread:$0]  %s1, 65536, %s177, [#allocation6], 512, 512, 32
        $region16: #{tpu_custom_call.1} parent=11 // pred_fallthru
          _
        // Predicated region
        $region17: #{tpu_custom_call.1} parent=11 // pred_check
          %p183 = pneg %p87
        $region18: #{tpu_custom_call.1} parent=11 // pred_check_branch
          %185 = sbr.rel (%p183) target = $region20
        $region19: #{tpu_custom_call.1} parent=11 // pred_region
          %s187 = ssub.s32 64, 64
          %188 = vsyncadd [#allocation6], %s187
          %s190 = sshll.u32 [#allocation7], 4
          %s191 = int_to_ptr.vmem [resolvable:$true] %s190
          %193 = dma.hbm_to_vmem [thread:$0]  %s2, 64, %s191, [#allocation6]
        $region20: #{tpu_custom_call.1} parent=11 // pred_fallthru
          _
        // Predicated region
        $region21: #{tpu_custom_call.1} parent=11 // pred_check
          %p194 = pneg %p108
        $region22: #{tpu_custom_call.1} parent=11 // pred_check_branch
          %196 = sbr.rel (%p194) target = $region24
        $region23: #{tpu_custom_call.1} parent=11 // pred_region
          %s198 = ssub.s32 65536, 65536
          %199 = vsyncadd [#allocation9], %s198
          %s200 = sshll.u32 [#allocation8], 4
          %s201 = int_to_ptr.vmem [resolvable:$true] %s200
          %206 = dma.hbm_to_vmem [thread:$0]  %s3, 65536, %s201, [#allocation9], 1024, 1024, 64
        $region24: #{tpu_custom_call.1} parent=11 // pred_fallthru
          _
        // Predicated region
        $region25: #{tpu_custom_call.1} parent=11 // pred_check
          %p207 = pneg %p129
        $region26: #{tpu_custom_call.1} parent=11 // pred_check_branch
          %209 = sbr.rel (%p207) target = $region28
        $region27: #{tpu_custom_call.1} parent=11 // pred_region
          %s211 = ssub.s32 128, 128
          %212 = vsyncadd [#allocation9], %s211
          %s214 = sshll.u32 [#allocation10], 4
          %s215 = int_to_ptr.vmem [resolvable:$true] %s214
          %217 = dma.hbm_to_vmem [thread:$0]  %s4, 128, %s215, [#allocation9]
        $region28: #{tpu_custom_call.1} parent=11 // pred_fallthru
          _
      $region12: #{tpu_custom_call.1} parent=5 // pred_fallthru
        _
      %p218 = scmp.lt.s32.totalorder %s19, 2
      // Predicated region
      $region29: #{tpu_custom_call.1} parent=5 // pred_check
        %p219 = pneg %p218
      $region30: #{tpu_custom_call.1} parent=5 // pred_check_branch
        %221 = sbr.rel (%p219) target = $region32
      $region31: #{tpu_custom_call.1} parent=5 // pred_region
        // Predicated region
        $region33: #{tpu_custom_call.1} parent=31 // pred_check
          %p222 = pneg %p39
        $region34: #{tpu_custom_call.1} parent=31 // pred_check_branch
          %224 = sbr.rel (%p222) target = $region36
        $region35: #{tpu_custom_call.1} parent=31 // pred_region
          %s225 = sand.u32 %s29, 1
          %s226 = scalar_lea.sflag [#allocation3], %s225
          %s227 = sand.u32 %s29, 1
          %s228 = smul.addr %s227, 64
          %s229 = scalar_lea.vmem [#allocation2], %s228
          %s231 = ssub.s32 1024, 1024
          %232 = vsyncadd %s226, %s231
          %s233 = smul.addr %s19, 8
          %s234 = smul.addr %s233, 128
          %s235 = scalar_lea.hbm %s0, %s234
          %s237 = sshll.u32 %s229, 4
          %s238 = int_to_ptr.vmem [resolvable:$true] %s237
          %240 = dma.hbm_to_vmem [thread:$0]  %s235, 1024, %s238, %s226
        $region36: #{tpu_custom_call.1} parent=31 // pred_fallthru
          _
      $region32: #{tpu_custom_call.1} parent=5 // pred_fallthru
        _
      %p241 = scmp.le.s32.totalorder 1, %s19
      %p242 = scmp.lt.s32.totalorder %s19, 3
      %p243 = pnand %p241, %p242
      %p244 = pneg %p243
      // Predicated region
      $region37: #{tpu_custom_call.1} parent=5 // pred_check
        _
      $region38: #{tpu_custom_call.1} parent=5 // pred_check_branch
        %246 = sbr.rel (%p243) target = $region40
      $region39: #{tpu_custom_call.1} parent=5 // pred_region
        %s247 = ssub.s32 %s19, 1
        %s248 = sand.u32 %s32, 1
        %s249 = scalar_lea.sflag [#allocation3], %s248
        %s250 = sand.u32 %s32, 1
        %s251 = smul.addr %s250, 64
        %s252 = scalar_lea.vmem [#allocation2], %s251
        // Predicated region
        $region41: #{tpu_custom_call.1} parent=39 // pred_check
          %p253 = pneg %p45
        $region42: #{tpu_custom_call.1} parent=39 // pred_check_branch
          %255 = sbr.rel (%p253) target = $region44
        $region43: #{tpu_custom_call.1} parent=39 // pred_region
          %256 = dma.done %s249, 1024
        $region44: #{tpu_custom_call.1} parent=39 // pred_fallthru
          _
        // Predicated region
        $region45: #{tpu_custom_call.1} parent=39 // pred_check
          %p257 = pneg %p66
        $region46: #{tpu_custom_call.1} parent=39 // pred_check_branch
          %259 = sbr.rel (%p257) target = $region48
        $region47: #{tpu_custom_call.1} parent=39 // pred_region
          %260 = dma.done [#allocation6], 65536
        $region48: #{tpu_custom_call.1} parent=39 // pred_fallthru
          _
        // Predicated region
        $region49: #{tpu_custom_call.1} parent=39 // pred_check
          %p261 = pneg %p87
        $region50: #{tpu_custom_call.1} parent=39 // pred_check_branch
          %263 = sbr.rel (%p261) target = $region52
        $region51: #{tpu_custom_call.1} parent=39 // pred_region
          %264 = dma.done [#allocation6], 64
        $region52: #{tpu_custom_call.1} parent=39 // pred_fallthru
          _
        // Predicated region
        $region53: #{tpu_custom_call.1} parent=39 // pred_check
          %p265 = pneg %p108
        $region54: #{tpu_custom_call.1} parent=39 // pred_check_branch
          %267 = sbr.rel (%p265) target = $region56
        $region55: #{tpu_custom_call.1} parent=39 // pred_region
          %268 = dma.done [#allocation9], 65536
        $region56: #{tpu_custom_call.1} parent=39 // pred_fallthru
          _
        // Predicated region
        $region57: #{tpu_custom_call.1} parent=39 // pred_check
          %p269 = pneg %p129
        $region58: #{tpu_custom_call.1} parent=39 // pred_check_branch
          %271 = sbr.rel (%p269) target = $region60
        $region59: #{tpu_custom_call.1} parent=39 // pred_region
          %272 = dma.done [#allocation9], 128
        $region60: #{tpu_custom_call.1} parent=39 // pred_fallthru
          _
        %s273 = sand.u32 %s32, 1
        %s274 = scalar_lea.sflag [#allocation3], %s273
        %s275 = sand.u32 %s32, 1
        %s276 = smul.addr %s275, 64
        %s277 = scalar_lea.vmem [#allocation2], %s276
        %p278 = pneg %p45
        %p279 = pneg %p42
        %p280 = pneg %p66
        %p281 = pneg %p63
        %p282 = pneg %p87
        %p283 = pneg %p84
        %p284 = pneg %p108
        %p285 = pneg %p105
        %p286 = pneg %p129
        %p287 = pneg %p126
        %p288 = pneg %p155
        %p289 = pneg %p152
        %s290 = sand.u32 %s142, 1
        %s291 = scalar_lea.sflag [#allocation4], %s290
        %s292 = sand.u32 %s142, 1
        %s293 = smul.addr %s292, 64
        %s294 = scalar_lea.vmem [#allocation11], %s293
        %v295 = vld [vmem:[%s252] sm:$0xff]
        %v296 = vld [vmem:[%s252 + $0x8] sm:$0xff]
        %v297 = vld [vmem:[%s252 + $0x10] sm:$0xff]
        %v298 = vld [vmem:[%s252 + $0x18] sm:$0xff]
        %v299 = vld [vmem:[%s252 + $0x20] sm:$0xff]
        %v300 = vld [vmem:[%s252 + $0x28] sm:$0xff]
        %v301 = vld [vmem:[%s252 + $0x30] sm:$0xff]
        %v302 = vld [vmem:[%s252 + $0x38] sm:$0xff]
        %v303 = vld [vmem:[#allocation5] sm:$0xff]
        %v304 = vld [vmem:[#allocation5 + $0x8] sm:$0xff]
        %v305 = vld [vmem:[#allocation5 + $0x10] sm:$0xff]
        %v306 = vld [vmem:[#allocation5 + $0x18] sm:$0xff]
        %v307 = vld [vmem:[#allocation5 + $0x20] sm:$0xff]
        %v308 = vld [vmem:[#allocation5 + $0x28] sm:$0xff]
        %v309 = vld [vmem:[#allocation5 + $0x30] sm:$0xff]
        %v310 = vld [vmem:[#allocation5 + $0x38] sm:$0xff]
        %v311 = vld [vmem:[#allocation5 + $0x40] sm:$0xff]
        %v312 = vld [vmem:[#allocation5 + $0x48] sm:$0xff]
        %v313 = vld [vmem:[#allocation5 + $0x50] sm:$0xff]
        %v314 = vld [vmem:[#allocation5 + $0x58] sm:$0xff]
        %v315 = vld [vmem:[#allocation5 + $0x60] sm:$0xff]
        %v316 = vld [vmem:[#allocation5 + $0x68] sm:$0xff]
        %v317 = vld [vmem:[#allocation5 + $0x70] sm:$0xff]
        %v318 = vld [vmem:[#allocation5 + $0x78] sm:$0xff]
        %v319 = vld [vmem:[#allocation5 + $0x80] sm:$0xff]
        %v320 = vld [vmem:[#allocation5 + $0x88] sm:$0xff]
        %v321 = vld [vmem:[#allocation5 + $0x90] sm:$0xff]
        %v322 = vld [vmem:[#allocation5 + $0x98] sm:$0xff]
        %v323 = vld [vmem:[#allocation5 + $0xa0] sm:$0xff]
        %v324 = vld [vmem:[#allocation5 + $0xa8] sm:$0xff]
        %v325 = vld [vmem:[#allocation5 + $0xb0] sm:$0xff]
        %v326 = vld [vmem:[#allocation5 + $0xb8] sm:$0xff]
        %v327 = vld [vmem:[#allocation5 + $0xc0] sm:$0xff]
        %v328 = vld [vmem:[#allocation5 + $0xc8] sm:$0xff]
        %v329 = vld [vmem:[#allocation5 + $0xd0] sm:$0xff]
        %v330 = vld [vmem:[#allocation5 + $0xd8] sm:$0xff]
        %v331 = vld [vmem:[#allocation5 + $0xe0] sm:$0xff]
        %v332 = vld [vmem:[#allocation5 + $0xe8] sm:$0xff]
        %v333 = vld [vmem:[#allocation5 + $0xf0] sm:$0xff]
        %v334 = vld [vmem:[#allocation5 + $0xf8] sm:$0xff]
        %v335 = vld [vmem:[#allocation5 + $0x100] sm:$0xff]
        %v336 = vld [vmem:[#allocation5 + $0x108] sm:$0xff]
        %v337 = vld [vmem:[#allocation5 + $0x110] sm:$0xff]
        %v338 = vld [vmem:[#allocation5 + $0x118] sm:$0xff]
        %v339 = vld [vmem:[#allocation5 + $0x120] sm:$0xff]
        %v340 = vld [vmem:[#allocation5 + $0x128] sm:$0xff]
        %v341 = vld [vmem:[#allocation5 + $0x130] sm:$0xff]
        %v342 = vld [vmem:[#allocation5 + $0x138] sm:$0xff]
        %v343 = vld [vmem:[#allocation5 + $0x140] sm:$0xff]
        %v344 = vld [vmem:[#allocation5 + $0x148] sm:$0xff]
        %v345 = vld [vmem:[#allocation5 + $0x150] sm:$0xff]
        %v346 = vld [vmem:[#allocation5 + $0x158] sm:$0xff]
        %v347 = vld [vmem:[#allocation5 + $0x160] sm:$0xff]
        %v348 = vld [vmem:[#allocation5 + $0x168] sm:$0xff]
        %v349 = vld [vmem:[#allocation5 + $0x170] sm:$0xff]
        %v350 = vld [vmem:[#allocation5 + $0x178] sm:$0xff]
        %v351 = vld [vmem:[#allocation5 + $0x180] sm:$0xff]
        %v352 = vld [vmem:[#allocation5 + $0x188] sm:$0xff]
        %v353 = vld [vmem:[#allocation5 + $0x190] sm:$0xff]
        %v354 = vld [vmem:[#allocation5 + $0x198] sm:$0xff]
        %v355 = vld [vmem:[#allocation5 + $0x1a0] sm:$0xff]
        %v356 = vld [vmem:[#allocation5 + $0x1a8] sm:$0xff]
        %v357 = vld [vmem:[#allocation5 + $0x1b0] sm:$0xff]
        %v358 = vld [vmem:[#allocation5 + $0x1b8] sm:$0xff]
        %v359 = vld [vmem:[#allocation5 + $0x1c0] sm:$0xff]
        %v360 = vld [vmem:[#allocation5 + $0x1c8] sm:$0xff]
        %v361 = vld [vmem:[#allocation5 + $0x1d0] sm:$0xff]
        %v362 = vld [vmem:[#allocation5 + $0x1d8] sm:$0xff]
        %v363 = vld [vmem:[#allocation5 + $0x1e0] sm:$0xff]
        %v364 = vld [vmem:[#allocation5 + $0x1e8] sm:$0xff]
        %v365 = vld [vmem:[#allocation5 + $0x1f0] sm:$0xff]
        %v366 = vld [vmem:[#allocation5 + $0x1f8] sm:$0xff]
        %v367 = vld [vmem:[#allocation5 + $0x200] sm:$0xff]
        %v368 = vld [vmem:[#allocation5 + $0x208] sm:$0xff]
        %v369 = vld [vmem:[#allocation5 + $0x210] sm:$0xff]
        %v370 = vld [vmem:[#allocation5 + $0x218] sm:$0xff]
        %v371 = vld [vmem:[#allocation5 + $0x220] sm:$0xff]
        %v372 = vld [vmem:[#allocation5 + $0x228] sm:$0xff]
        %v373 = vld [vmem:[#allocation5 + $0x230] sm:$0xff]
        %v374 = vld [vmem:[#allocation5 + $0x238] sm:$0xff]
        %v375 = vld [vmem:[#allocation5 + $0x240] sm:$0xff]
        %v376 = vld [vmem:[#allocation5 + $0x248] sm:$0xff]
        %v377 = vld [vmem:[#allocation5 + $0x250] sm:$0xff]
        %v378 = vld [vmem:[#allocation5 + $0x258] sm:$0xff]
        %v379 = vld [vmem:[#allocation5 + $0x260] sm:$0xff]
        %v380 = vld [vmem:[#allocation5 + $0x268] sm:$0xff]
        %v381 = vld [vmem:[#allocation5 + $0x270] sm:$0xff]
        %v382 = vld [vmem:[#allocation5 + $0x278] sm:$0xff]
        %v383 = vld [vmem:[#allocation5 + $0x280] sm:$0xff]
        %v384 = vld [vmem:[#allocation5 + $0x288] sm:$0xff]
        %v385 = vld [vmem:[#allocation5 + $0x290] sm:$0xff]
        %v386 = vld [vmem:[#allocation5 + $0x298] sm:$0xff]
        %v387 = vld [vmem:[#allocation5 + $0x2a0] sm:$0xff]
        %v388 = vld [vmem:[#allocation5 + $0x2a8] sm:$0xff]
        %v389 = vld [vmem:[#allocation5 + $0x2b0] sm:$0xff]
        %v390 = vld [vmem:[#allocation5 + $0x2b8] sm:$0xff]
        %v391 = vld [vmem:[#allocation5 + $0x2c0] sm:$0xff]
        %v392 = vld [vmem:[#allocation5 + $0x2c8] sm:$0xff]
        %v393 = vld [vmem:[#allocation5 + $0x2d0] sm:$0xff]
        %v394 = vld [vmem:[#allocation5 + $0x2d8] sm:$0xff]
        %v395 = vld [vmem:[#allocation5 + $0x2e0] sm:$0xff]
        %v396 = vld [vmem:[#allocation5 + $0x2e8] sm:$0xff]
        %v397 = vld [vmem:[#allocation5 + $0x2f0] sm:$0xff]
        %v398 = vld [vmem:[#allocation5 + $0x2f8] sm:$0xff]
        %v399 = vld [vmem:[#allocation5 + $0x300] sm:$0xff]
        %v400 = vld [vmem:[#allocation5 + $0x308] sm:$0xff]
        %v401 = vld [vmem:[#allocation5 + $0x310] sm:$0xff]
        %v402 = vld [vmem:[#allocation5 + $0x318] sm:$0xff]
        %v403 = vld [vmem:[#allocation5 + $0x320] sm:$0xff]
        %v404 = vld [vmem:[#allocation5 + $0x328] sm:$0xff]
        %v405 = vld [vmem:[#allocation5 + $0x330] sm:$0xff]
        %v406 = vld [vmem:[#allocation5 + $0x338] sm:$0xff]
        %v407 = vld [vmem:[#allocation5 + $0x340] sm:$0xff]
        %v408 = vld [vmem:[#allocation5 + $0x348] sm:$0xff]
        %v409 = vld [vmem:[#allocation5 + $0x350] sm:$0xff]
        %v410 = vld [vmem:[#allocation5 + $0x358] sm:$0xff]
        %v411 = vld [vmem:[#allocation5 + $0x360] sm:$0xff]
        %v412 = vld [vmem:[#allocation5 + $0x368] sm:$0xff]
        %v413 = vld [vmem:[#allocation5 + $0x370] sm:$0xff]
        %v414 = vld [vmem:[#allocation5 + $0x378] sm:$0xff]
        %v415 = vld [vmem:[#allocation5 + $0x380] sm:$0xff]
        %v416 = vld [vmem:[#allocation5 + $0x388] sm:$0xff]
        %v417 = vld [vmem:[#allocation5 + $0x390] sm:$0xff]
        %v418 = vld [vmem:[#allocation5 + $0x398] sm:$0xff]
        %v419 = vld [vmem:[#allocation5 + $0x3a0] sm:$0xff]
        %v420 = vld [vmem:[#allocation5 + $0x3a8] sm:$0xff]
        %v421 = vld [vmem:[#allocation5 + $0x3b0] sm:$0xff]
        %v422 = vld [vmem:[#allocation5 + $0x3b8] sm:$0xff]
        %v423 = vld [vmem:[#allocation5 + $0x3c0] sm:$0xff]
        %v424 = vld [vmem:[#allocation5 + $0x3c8] sm:$0xff]
        %v425 = vld [vmem:[#allocation5 + $0x3d0] sm:$0xff]
        %v426 = vld [vmem:[#allocation5 + $0x3d8] sm:$0xff]
        %v427 = vld [vmem:[#allocation5 + $0x3e0] sm:$0xff]
        %v428 = vld [vmem:[#allocation5 + $0x3e8] sm:$0xff]
        %v429 = vld [vmem:[#allocation5 + $0x3f0] sm:$0xff]
        %v430 = vld [vmem:[#allocation5 + $0x3f8] sm:$0xff]
        %v431 = vld [vmem:[#allocation5 + $0x400] sm:$0xff]
        %v432 = vld [vmem:[#allocation5 + $0x408] sm:$0xff]
        %v433 = vld [vmem:[#allocation5 + $0x410] sm:$0xff]
        %v434 = vld [vmem:[#allocation5 + $0x418] sm:$0xff]
        %v435 = vld [vmem:[#allocation5 + $0x420] sm:$0xff]
        %v436 = vld [vmem:[#allocation5 + $0x428] sm:$0xff]
        %v437 = vld [vmem:[#allocation5 + $0x430] sm:$0xff]
        %v438 = vld [vmem:[#allocation5 + $0x438] sm:$0xff]
        %v439 = vld [vmem:[#allocation5 + $0x440] sm:$0xff]
        %v440 = vld [vmem:[#allocation5 + $0x448] sm:$0xff]
        %v441 = vld [vmem:[#allocation5 + $0x450] sm:$0xff]
        %v442 = vld [vmem:[#allocation5 + $0x458] sm:$0xff]
        %v443 = vld [vmem:[#allocation5 + $0x460] sm:$0xff]
        %v444 = vld [vmem:[#allocation5 + $0x468] sm:$0xff]
        %v445 = vld [vmem:[#allocation5 + $0x470] sm:$0xff]
        %v446 = vld [vmem:[#allocation5 + $0x478] sm:$0xff]
        %v447 = vld [vmem:[#allocation5 + $0x480] sm:$0xff]
        %v448 = vld [vmem:[#allocation5 + $0x488] sm:$0xff]
        %v449 = vld [vmem:[#allocation5 + $0x490] sm:$0xff]
        %v450 = vld [vmem:[#allocation5 + $0x498] sm:$0xff]
        %v451 = vld [vmem:[#allocation5 + $0x4a0] sm:$0xff]
        %v452 = vld [vmem:[#allocation5 + $0x4a8] sm:$0xff]
        %v453 = vld [vmem:[#allocation5 + $0x4b0] sm:$0xff]
        %v454 = vld [vmem:[#allocation5 + $0x4b8] sm:$0xff]
        %v455 = vld [vmem:[#allocation5 + $0x4c0] sm:$0xff]
        %v456 = vld [vmem:[#allocation5 + $0x4c8] sm:$0xff]
        %v457 = vld [vmem:[#allocation5 + $0x4d0] sm:$0xff]
        %v458 = vld [vmem:[#allocation5 + $0x4d8] sm:$0xff]
        %v459 = vld [vmem:[#allocation5 + $0x4e0] sm:$0xff]
        %v460 = vld [vmem:[#allocation5 + $0x4e8] sm:$0xff]
        %v461 = vld [vmem:[#allocation5 + $0x4f0] sm:$0xff]
        %v462 = vld [vmem:[#allocation5 + $0x4f8] sm:$0xff]
        %v463 = vld [vmem:[#allocation5 + $0x500] sm:$0xff]
        %v464 = vld [vmem:[#allocation5 + $0x508] sm:$0xff]
        %v465 = vld [vmem:[#allocation5 + $0x510] sm:$0xff]
        %v466 = vld [vmem:[#allocation5 + $0x518] sm:$0xff]
        %v467 = vld [vmem:[#allocation5 + $0x520] sm:$0xff]
        %v468 = vld [vmem:[#allocation5 + $0x528] sm:$0xff]
        %v469 = vld [vmem:[#allocation5 + $0x530] sm:$0xff]
        %v470 = vld [vmem:[#allocation5 + $0x538] sm:$0xff]
        %v471 = vld [vmem:[#allocation5 + $0x540] sm:$0xff]
        %v472 = vld [vmem:[#allocation5 + $0x548] sm:$0xff]
        %v473 = vld [vmem:[#allocation5 + $0x550] sm:$0xff]
        %v474 = vld [vmem:[#allocation5 + $0x558] sm:$0xff]
        %v475 = vld [vmem:[#allocation5 + $0x560] sm:$0xff]
        %v476 = vld [vmem:[#allocation5 + $0x568] sm:$0xff]
        %v477 = vld [vmem:[#allocation5 + $0x570] sm:$0xff]
        %v478 = vld [vmem:[#allocation5 + $0x578] sm:$0xff]
        %v479 = vld [vmem:[#allocation5 + $0x580] sm:$0xff]
        %v480 = vld [vmem:[#allocation5 + $0x588] sm:$0xff]
        %v481 = vld [vmem:[#allocation5 + $0x590] sm:$0xff]
        %v482 = vld [vmem:[#allocation5 + $0x598] sm:$0xff]
        %v483 = vld [vmem:[#allocation5 + $0x5a0] sm:$0xff]
        %v484 = vld [vmem:[#allocation5 + $0x5a8] sm:$0xff]
        %v485 = vld [vmem:[#allocation5 + $0x5b0] sm:$0xff]
        %v486 = vld [vmem:[#allocation5 + $0x5b8] sm:$0xff]
        %v487 = vld [vmem:[#allocation5 + $0x5c0] sm:$0xff]
        %v488 = vld [vmem:[#allocation5 + $0x5c8] sm:$0xff]
        %v489 = vld [vmem:[#allocation5 + $0x5d0] sm:$0xff]
        %v490 = vld [vmem:[#allocation5 + $0x5d8] sm:$0xff]
        %v491 = vld [vmem:[#allocation5 + $0x5e0] sm:$0xff]
        %v492 = vld [vmem:[#allocation5 + $0x5e8] sm:$0xff]
        %v493 = vld [vmem:[#allocation5 + $0x5f0] sm:$0xff]
        %v494 = vld [vmem:[#allocation5 + $0x5f8] sm:$0xff]
        %v495 = vld [vmem:[#allocation5 + $0x600] sm:$0xff]
        %v496 = vld [vmem:[#allocation5 + $0x608] sm:$0xff]
        %v497 = vld [vmem:[#allocation5 + $0x610] sm:$0xff]
        %v498 = vld [vmem:[#allocation5 + $0x618] sm:$0xff]
        %v499 = vld [vmem:[#allocation5 + $0x620] sm:$0xff]
        %v500 = vld [vmem:[#allocation5 + $0x628] sm:$0xff]
        %v501 = vld [vmem:[#allocation5 + $0x630] sm:$0xff]
        %v502 = vld [vmem:[#allocation5 + $0x638] sm:$0xff]
        %v503 = vld [vmem:[#allocation5 + $0x640] sm:$0xff]
        %v504 = vld [vmem:[#allocation5 + $0x648] sm:$0xff]
        %v505 = vld [vmem:[#allocation5 + $0x650] sm:$0xff]
        %v506 = vld [vmem:[#allocation5 + $0x658] sm:$0xff]
        %v507 = vld [vmem:[#allocation5 + $0x660] sm:$0xff]
        %v508 = vld [vmem:[#allocation5 + $0x668] sm:$0xff]
        %v509 = vld [vmem:[#allocation5 + $0x670] sm:$0xff]
        %v510 = vld [vmem:[#allocation5 + $0x678] sm:$0xff]
        %v511 = vld [vmem:[#allocation5 + $0x680] sm:$0xff]
        %v512 = vld [vmem:[#allocation5 + $0x688] sm:$0xff]
        %v513 = vld [vmem:[#allocation5 + $0x690] sm:$0xff]
        %v514 = vld [vmem:[#allocation5 + $0x698] sm:$0xff]
        %v515 = vld [vmem:[#allocation5 + $0x6a0] sm:$0xff]
        %v516 = vld [vmem:[#allocation5 + $0x6a8] sm:$0xff]
        %v517 = vld [vmem:[#allocation5 + $0x6b0] sm:$0xff]
        %v518 = vld [vmem:[#allocation5 + $0x6b8] sm:$0xff]
        %v519 = vld [vmem:[#allocation5 + $0x6c0] sm:$0xff]
        %v520 = vld [vmem:[#allocation5 + $0x6c8] sm:$0xff]
        %v521 = vld [vmem:[#allocation5 + $0x6d0] sm:$0xff]
        %v522 = vld [vmem:[#allocation5 + $0x6d8] sm:$0xff]
        %v523 = vld [vmem:[#allocation5 + $0x6e0] sm:$0xff]
        %v524 = vld [vmem:[#allocation5 + $0x6e8] sm:$0xff]
        %v525 = vld [vmem:[#allocation5 + $0x6f0] sm:$0xff]
        %v526 = vld [vmem:[#allocation5 + $0x6f8] sm:$0xff]
        %v527 = vld [vmem:[#allocation5 + $0x700] sm:$0xff]
        %v528 = vld [vmem:[#allocation5 + $0x708] sm:$0xff]
        %v529 = vld [vmem:[#allocation5 + $0x710] sm:$0xff]
        %v530 = vld [vmem:[#allocation5 + $0x718] sm:$0xff]
        %v531 = vld [vmem:[#allocation5 + $0x720] sm:$0xff]
        %v532 = vld [vmem:[#allocation5 + $0x728] sm:$0xff]
        %v533 = vld [vmem:[#allocation5 + $0x730] sm:$0xff]
        %v534 = vld [vmem:[#allocation5 + $0x738] sm:$0xff]
        %v535 = vld [vmem:[#allocation5 + $0x740] sm:$0xff]
        %v536 = vld [vmem:[#allocation5 + $0x748] sm:$0xff]
        %v537 = vld [vmem:[#allocation5 + $0x750] sm:$0xff]
        %v538 = vld [vmem:[#allocation5 + $0x758] sm:$0xff]
        %v539 = vld [vmem:[#allocation5 + $0x760] sm:$0xff]
        %v540 = vld [vmem:[#allocation5 + $0x768] sm:$0xff]
        %v541 = vld [vmem:[#allocation5 + $0x770] sm:$0xff]
        %v542 = vld [vmem:[#allocation5 + $0x778] sm:$0xff]
        %v543 = vld [vmem:[#allocation5 + $0x780] sm:$0xff]
        %v544 = vld [vmem:[#allocation5 + $0x788] sm:$0xff]
        %v545 = vld [vmem:[#allocation5 + $0x790] sm:$0xff]
        %v546 = vld [vmem:[#allocation5 + $0x798] sm:$0xff]
        %v547 = vld [vmem:[#allocation5 + $0x7a0] sm:$0xff]
        %v548 = vld [vmem:[#allocation5 + $0x7a8] sm:$0xff]
        %v549 = vld [vmem:[#allocation5 + $0x7b0] sm:$0xff]
        %v550 = vld [vmem:[#allocation5 + $0x7b8] sm:$0xff]
        %v551 = vld [vmem:[#allocation5 + $0x7c0] sm:$0xff]
        %v552 = vld [vmem:[#allocation5 + $0x7c8] sm:$0xff]
        %v553 = vld [vmem:[#allocation5 + $0x7d0] sm:$0xff]
        %v554 = vld [vmem:[#allocation5 + $0x7d8] sm:$0xff]
        %v555 = vld [vmem:[#allocation5 + $0x7e0] sm:$0xff]
        %v556 = vld [vmem:[#allocation5 + $0x7e8] sm:$0xff]
        %v557 = vld [vmem:[#allocation5 + $0x7f0] sm:$0xff]
        %v558 = vld [vmem:[#allocation5 + $0x7f8] sm:$0xff]
        %v559 = vld [vmem:[#allocation5 + $0x800] sm:$0xff]
        %v560 = vld [vmem:[#allocation5 + $0x808] sm:$0xff]
        %v561 = vld [vmem:[#allocation5 + $0x810] sm:$0xff]
        %v562 = vld [vmem:[#allocation5 + $0x818] sm:$0xff]
        %v563 = vld [vmem:[#allocation5 + $0x820] sm:$0xff]
        %v564 = vld [vmem:[#allocation5 + $0x828] sm:$0xff]
        %v565 = vld [vmem:[#allocation5 + $0x830] sm:$0xff]
        %v566 = vld [vmem:[#allocation5 + $0x838] sm:$0xff]
        %v567 = vld [vmem:[#allocation5 + $0x840] sm:$0xff]
        %v568 = vld [vmem:[#allocation5 + $0x848] sm:$0xff]
        %v569 = vld [vmem:[#allocation5 + $0x850] sm:$0xff]
        %v570 = vld [vmem:[#allocation5 + $0x858] sm:$0xff]
        %v571 = vld [vmem:[#allocation5 + $0x860] sm:$0xff]
        %v572 = vld [vmem:[#allocation5 + $0x868] sm:$0xff]
        %v573 = vld [vmem:[#allocation5 + $0x870] sm:$0xff]
        %v574 = vld [vmem:[#allocation5 + $0x878] sm:$0xff]
        %v575 = vld [vmem:[#allocation5 + $0x880] sm:$0xff]
        %v576 = vld [vmem:[#allocation5 + $0x888] sm:$0xff]
        %v577 = vld [vmem:[#allocation5 + $0x890] sm:$0xff]
        %v578 = vld [vmem:[#allocation5 + $0x898] sm:$0xff]
        %v579 = vld [vmem:[#allocation5 + $0x8a0] sm:$0xff]
        %v580 = vld [vmem:[#allocation5 + $0x8a8] sm:$0xff]
        %v581 = vld [vmem:[#allocation5 + $0x8b0] sm:$0xff]
        %v582 = vld [vmem:[#allocation5 + $0x8b8] sm:$0xff]
        %v583 = vld [vmem:[#allocation5 + $0x8c0] sm:$0xff]
        %v584 = vld [vmem:[#allocation5 + $0x8c8] sm:$0xff]
        %v585 = vld [vmem:[#allocation5 + $0x8d0] sm:$0xff]
        %v586 = vld [vmem:[#allocation5 + $0x8d8] sm:$0xff]
        %v587 = vld [vmem:[#allocation5 + $0x8e0] sm:$0xff]
        %v588 = vld [vmem:[#allocation5 + $0x8e8] sm:$0xff]
        %v589 = vld [vmem:[#allocation5 + $0x8f0] sm:$0xff]
        %v590 = vld [vmem:[#allocation5 + $0x8f8] sm:$0xff]
        %v591 = vld [vmem:[#allocation5 + $0x900] sm:$0xff]
        %v592 = vld [vmem:[#allocation5 + $0x908] sm:$0xff]
        %v593 = vld [vmem:[#allocation5 + $0x910] sm:$0xff]
        %v594 = vld [vmem:[#allocation5 + $0x918] sm:$0xff]
        %v595 = vld [vmem:[#allocation5 + $0x920] sm:$0xff]
        %v596 = vld [vmem:[#allocation5 + $0x928] sm:$0xff]
        %v597 = vld [vmem:[#allocation5 + $0x930] sm:$0xff]
        %v598 = vld [vmem:[#allocation5 + $0x938] sm:$0xff]
        %v599 = vld [vmem:[#allocation5 + $0x940] sm:$0xff]
        %v600 = vld [vmem:[#allocation5 + $0x948] sm:$0xff]
        %v601 = vld [vmem:[#allocation5 + $0x950] sm:$0xff]
        %v602 = vld [vmem:[#allocation5 + $0x958] sm:$0xff]
        %v603 = vld [vmem:[#allocation5 + $0x960] sm:$0xff]
        %v604 = vld [vmem:[#allocation5 + $0x968] sm:$0xff]
        %v605 = vld [vmem:[#allocation5 + $0x970] sm:$0xff]
        %v606 = vld [vmem:[#allocation5 + $0x978] sm:$0xff]
        %v607 = vld [vmem:[#allocation5 + $0x980] sm:$0xff]
        %v608 = vld [vmem:[#allocation5 + $0x988] sm:$0xff]
        %v609 = vld [vmem:[#allocation5 + $0x990] sm:$0xff]
        %v610 = vld [vmem:[#allocation5 + $0x998] sm:$0xff]
        %v611 = vld [vmem:[#allocation5 + $0x9a0] sm:$0xff]
        %v612 = vld [vmem:[#allocation5 + $0x9a8] sm:$0xff]
        %v613 = vld [vmem:[#allocation5 + $0x9b0] sm:$0xff]
        %v614 = vld [vmem:[#allocation5 + $0x9b8] sm:$0xff]
        %v615 = vld [vmem:[#allocation5 + $0x9c0] sm:$0xff]
        %v616 = vld [vmem:[#allocation5 + $0x9c8] sm:$0xff]
        %v617 = vld [vmem:[#allocation5 + $0x9d0] sm:$0xff]
        %v618 = vld [vmem:[#allocation5 + $0x9d8] sm:$0xff]
        %v619 = vld [vmem:[#allocation5 + $0x9e0] sm:$0xff]
        %v620 = vld [vmem:[#allocation5 + $0x9e8] sm:$0xff]
        %v621 = vld [vmem:[#allocation5 + $0x9f0] sm:$0xff]
        %v622 = vld [vmem:[#allocation5 + $0x9f8] sm:$0xff]
        %v623 = vld [vmem:[#allocation5 + $0xa00] sm:$0xff]
        %v624 = vld [vmem:[#allocation5 + $0xa08] sm:$0xff]
        %v625 = vld [vmem:[#allocation5 + $0xa10] sm:$0xff]
        %v626 = vld [vmem:[#allocation5 + $0xa18] sm:$0xff]
        %v627 = vld [vmem:[#allocation5 + $0xa20] sm:$0xff]
        %v628 = vld [vmem:[#allocation5 + $0xa28] sm:$0xff]
        %v629 = vld [vmem:[#allocation5 + $0xa30] sm:$0xff]
        %v630 = vld [vmem:[#allocation5 + $0xa38] sm:$0xff]
        %v631 = vld [vmem:[#allocation5 + $0xa40] sm:$0xff]
        %v632 = vld [vmem:[#allocation5 + $0xa48] sm:$0xff]
        %v633 = vld [vmem:[#allocation5 + $0xa50] sm:$0xff]
        %v634 = vld [vmem:[#allocation5 + $0xa58] sm:$0xff]
        %v635 = vld [vmem:[#allocation5 + $0xa60] sm:$0xff]
        %v636 = vld [vmem:[#allocation5 + $0xa68] sm:$0xff]
        %v637 = vld [vmem:[#allocation5 + $0xa70] sm:$0xff]
        %v638 = vld [vmem:[#allocation5 + $0xa78] sm:$0xff]
        %v639 = vld [vmem:[#allocation5 + $0xa80] sm:$0xff]
        %v640 = vld [vmem:[#allocation5 + $0xa88] sm:$0xff]
        %v641 = vld [vmem:[#allocation5 + $0xa90] sm:$0xff]
        %v642 = vld [vmem:[#allocation5 + $0xa98] sm:$0xff]
        %v643 = vld [vmem:[#allocation5 + $0xaa0] sm:$0xff]
        %v644 = vld [vmem:[#allocation5 + $0xaa8] sm:$0xff]
        %v645 = vld [vmem:[#allocation5 + $0xab0] sm:$0xff]
        %v646 = vld [vmem:[#allocation5 + $0xab8] sm:$0xff]
        %v647 = vld [vmem:[#allocation5 + $0xac0] sm:$0xff]
        %v648 = vld [vmem:[#allocation5 + $0xac8] sm:$0xff]
        %v649 = vld [vmem:[#allocation5 + $0xad0] sm:$0xff]
        %v650 = vld [vmem:[#allocation5 + $0xad8] sm:$0xff]
        %v651 = vld [vmem:[#allocation5 + $0xae0] sm:$0xff]
        %v652 = vld [vmem:[#allocation5 + $0xae8] sm:$0xff]
        %v653 = vld [vmem:[#allocation5 + $0xaf0] sm:$0xff]
        %v654 = vld [vmem:[#allocation5 + $0xaf8] sm:$0xff]
        %v655 = vld [vmem:[#allocation5 + $0xb00] sm:$0xff]
        %v656 = vld [vmem:[#allocation5 + $0xb08] sm:$0xff]
        %v657 = vld [vmem:[#allocation5 + $0xb10] sm:$0xff]
        %v658 = vld [vmem:[#allocation5 + $0xb18] sm:$0xff]
        %v659 = vld [vmem:[#allocation5 + $0xb20] sm:$0xff]
        %v660 = vld [vmem:[#allocation5 + $0xb28] sm:$0xff]
        %v661 = vld [vmem:[#allocation5 + $0xb30] sm:$0xff]
        %v662 = vld [vmem:[#allocation5 + $0xb38] sm:$0xff]
        %v663 = vld [vmem:[#allocation5 + $0xb40] sm:$0xff]
        %v664 = vld [vmem:[#allocation5 + $0xb48] sm:$0xff]
        %v665 = vld [vmem:[#allocation5 + $0xb50] sm:$0xff]
        %v666 = vld [vmem:[#allocation5 + $0xb58] sm:$0xff]
        %v667 = vld [vmem:[#allocation5 + $0xb60] sm:$0xff]
        %v668 = vld [vmem:[#allocation5 + $0xb68] sm:$0xff]
        %v669 = vld [vmem:[#allocation5 + $0xb70] sm:$0xff]
        %v670 = vld [vmem:[#allocation5 + $0xb78] sm:$0xff]
        %v671 = vld [vmem:[#allocation5 + $0xb80] sm:$0xff]
        %v672 = vld [vmem:[#allocation5 + $0xb88] sm:$0xff]
        %v673 = vld [vmem:[#allocation5 + $0xb90] sm:$0xff]
        %v674 = vld [vmem:[#allocation5 + $0xb98] sm:$0xff]
        %v675 = vld [vmem:[#allocation5 + $0xba0] sm:$0xff]
        %v676 = vld [vmem:[#allocation5 + $0xba8] sm:$0xff]
        %v677 = vld [vmem:[#allocation5 + $0xbb0] sm:$0xff]
        %v678 = vld [vmem:[#allocation5 + $0xbb8] sm:$0xff]
        %v679 = vld [vmem:[#allocation5 + $0xbc0] sm:$0xff]
        %v680 = vld [vmem:[#allocation5 + $0xbc8] sm:$0xff]
        %v681 = vld [vmem:[#allocation5 + $0xbd0] sm:$0xff]
        %v682 = vld [vmem:[#allocation5 + $0xbd8] sm:$0xff]
        %v683 = vld [vmem:[#allocation5 + $0xbe0] sm:$0xff]
        %v684 = vld [vmem:[#allocation5 + $0xbe8] sm:$0xff]
        %v685 = vld [vmem:[#allocation5 + $0xbf0] sm:$0xff]
        %v686 = vld [vmem:[#allocation5 + $0xbf8] sm:$0xff]
        %v687 = vld [vmem:[#allocation5 + $0xc00] sm:$0xff]
        %v688 = vld [vmem:[#allocation5 + $0xc08] sm:$0xff]
        %v689 = vld [vmem:[#allocation5 + $0xc10] sm:$0xff]
        %v690 = vld [vmem:[#allocation5 + $0xc18] sm:$0xff]
        %v691 = vld [vmem:[#allocation5 + $0xc20] sm:$0xff]
        %v692 = vld [vmem:[#allocation5 + $0xc28] sm:$0xff]
        %v693 = vld [vmem:[#allocation5 + $0xc30] sm:$0xff]
        %v694 = vld [vmem:[#allocation5 + $0xc38] sm:$0xff]
        %v695 = vld [vmem:[#allocation5 + $0xc40] sm:$0xff]
        %v696 = vld [vmem:[#allocation5 + $0xc48] sm:$0xff]
        %v697 = vld [vmem:[#allocation5 + $0xc50] sm:$0xff]
        %v698 = vld [vmem:[#allocation5 + $0xc58] sm:$0xff]
        %v699 = vld [vmem:[#allocation5 + $0xc60] sm:$0xff]
        %v700 = vld [vmem:[#allocation5 + $0xc68] sm:$0xff]
        %v701 = vld [vmem:[#allocation5 + $0xc70] sm:$0xff]
        %v702 = vld [vmem:[#allocation5 + $0xc78] sm:$0xff]
        %v703 = vld [vmem:[#allocation5 + $0xc80] sm:$0xff]
        %v704 = vld [vmem:[#allocation5 + $0xc88] sm:$0xff]
        %v705 = vld [vmem:[#allocation5 + $0xc90] sm:$0xff]
        %v706 = vld [vmem:[#allocation5 + $0xc98] sm:$0xff]
        %v707 = vld [vmem:[#allocation5 + $0xca0] sm:$0xff]
        %v708 = vld [vmem:[#allocation5 + $0xca8] sm:$0xff]
        %v709 = vld [vmem:[#allocation5 + $0xcb0] sm:$0xff]
        %v710 = vld [vmem:[#allocation5 + $0xcb8] sm:$0xff]
        %v711 = vld [vmem:[#allocation5 + $0xcc0] sm:$0xff]
        %v712 = vld [vmem:[#allocation5 + $0xcc8] sm:$0xff]
        %v713 = vld [vmem:[#allocation5 + $0xcd0] sm:$0xff]
        %v714 = vld [vmem:[#allocation5 + $0xcd8] sm:$0xff]
        %v715 = vld [vmem:[#allocation5 + $0xce0] sm:$0xff]
        %v716 = vld [vmem:[#allocation5 + $0xce8] sm:$0xff]
        %v717 = vld [vmem:[#allocation5 + $0xcf0] sm:$0xff]
        %v718 = vld [vmem:[#allocation5 + $0xcf8] sm:$0xff]
        %v719 = vld [vmem:[#allocation5 + $0xd00] sm:$0xff]
        %v720 = vld [vmem:[#allocation5 + $0xd08] sm:$0xff]
        %v721 = vld [vmem:[#allocation5 + $0xd10] sm:$0xff]
        %v722 = vld [vmem:[#allocation5 + $0xd18] sm:$0xff]
        %v723 = vld [vmem:[#allocation5 + $0xd20] sm:$0xff]
        %v724 = vld [vmem:[#allocation5 + $0xd28] sm:$0xff]
        %v725 = vld [vmem:[#allocation5 + $0xd30] sm:$0xff]
        %v726 = vld [vmem:[#allocation5 + $0xd38] sm:$0xff]
        %v727 = vld [vmem:[#allocation5 + $0xd40] sm:$0xff]
        %v728 = vld [vmem:[#allocation5 + $0xd48] sm:$0xff]
        %v729 = vld [vmem:[#allocation5 + $0xd50] sm:$0xff]
        %v730 = vld [vmem:[#allocation5 + $0xd58] sm:$0xff]
        %v731 = vld [vmem:[#allocation5 + $0xd60] sm:$0xff]
        %v732 = vld [vmem:[#allocation5 + $0xd68] sm:$0xff]
        %v733 = vld [vmem:[#allocation5 + $0xd70] sm:$0xff]
        %v734 = vld [vmem:[#allocation5 + $0xd78] sm:$0xff]
        %v735 = vld [vmem:[#allocation5 + $0xd80] sm:$0xff]
        %v736 = vld [vmem:[#allocation5 + $0xd88] sm:$0xff]
        %v737 = vld [vmem:[#allocation5 + $0xd90] sm:$0xff]
        %v738 = vld [vmem:[#allocation5 + $0xd98] sm:$0xff]
        %v739 = vld [vmem:[#allocation5 + $0xda0] sm:$0xff]
        %v740 = vld [vmem:[#allocation5 + $0xda8] sm:$0xff]
        %v741 = vld [vmem:[#allocation5 + $0xdb0] sm:$0xff]
        %v742 = vld [vmem:[#allocation5 + $0xdb8] sm:$0xff]
        %v743 = vld [vmem:[#allocation5 + $0xdc0] sm:$0xff]
        %v744 = vld [vmem:[#allocation5 + $0xdc8] sm:$0xff]
        %v745 = vld [vmem:[#allocation5 + $0xdd0] sm:$0xff]
        %v746 = vld [vmem:[#allocation5 + $0xdd8] sm:$0xff]
        %v747 = vld [vmem:[#allocation5 + $0xde0] sm:$0xff]
        %v748 = vld [vmem:[#allocation5 + $0xde8] sm:$0xff]
        %v749 = vld [vmem:[#allocation5 + $0xdf0] sm:$0xff]
        %v750 = vld [vmem:[#allocation5 + $0xdf8] sm:$0xff]
        %v751 = vld [vmem:[#allocation5 + $0xe00] sm:$0xff]
        %v752 = vld [vmem:[#allocation5 + $0xe08] sm:$0xff]
        %v753 = vld [vmem:[#allocation5 + $0xe10] sm:$0xff]
        %v754 = vld [vmem:[#allocation5 + $0xe18] sm:$0xff]
        %v755 = vld [vmem:[#allocation5 + $0xe20] sm:$0xff]
        %v756 = vld [vmem:[#allocation5 + $0xe28] sm:$0xff]
        %v757 = vld [vmem:[#allocation5 + $0xe30] sm:$0xff]
        %v758 = vld [vmem:[#allocation5 + $0xe38] sm:$0xff]
        %v759 = vld [vmem:[#allocation5 + $0xe40] sm:$0xff]
        %v760 = vld [vmem:[#allocation5 + $0xe48] sm:$0xff]
        %v761 = vld [vmem:[#allocation5 + $0xe50] sm:$0xff]
        %v762 = vld [vmem:[#allocation5 + $0xe58] sm:$0xff]
        %v763 = vld [vmem:[#allocation5 + $0xe60] sm:$0xff]
        %v764 = vld [vmem:[#allocation5 + $0xe68] sm:$0xff]
        %v765 = vld [vmem:[#allocation5 + $0xe70] sm:$0xff]
        %v766 = vld [vmem:[#allocation5 + $0xe78] sm:$0xff]
        %v767 = vld [vmem:[#allocation5 + $0xe80] sm:$0xff]
        %v768 = vld [vmem:[#allocation5 + $0xe88] sm:$0xff]
        %v769 = vld [vmem:[#allocation5 + $0xe90] sm:$0xff]
        %v770 = vld [vmem:[#allocation5 + $0xe98] sm:$0xff]
        %v771 = vld [vmem:[#allocation5 + $0xea0] sm:$0xff]
        %v772 = vld [vmem:[#allocation5 + $0xea8] sm:$0xff]
        %v773 = vld [vmem:[#allocation5 + $0xeb0] sm:$0xff]
        %v774 = vld [vmem:[#allocation5 + $0xeb8] sm:$0xff]
        %v775 = vld [vmem:[#allocation5 + $0xec0] sm:$0xff]
        %v776 = vld [vmem:[#allocation5 + $0xec8] sm:$0xff]
        %v777 = vld [vmem:[#allocation5 + $0xed0] sm:$0xff]
        %v778 = vld [vmem:[#allocation5 + $0xed8] sm:$0xff]
        %v779 = vld [vmem:[#allocation5 + $0xee0] sm:$0xff]
        %v780 = vld [vmem:[#allocation5 + $0xee8] sm:$0xff]
        %v781 = vld [vmem:[#allocation5 + $0xef0] sm:$0xff]
        %v782 = vld [vmem:[#allocation5 + $0xef8] sm:$0xff]
        %v783 = vld [vmem:[#allocation5 + $0xf00] sm:$0xff]
        %v784 = vld [vmem:[#allocation5 + $0xf08] sm:$0xff]
        %v785 = vld [vmem:[#allocation5 + $0xf10] sm:$0xff]
        %v786 = vld [vmem:[#allocation5 + $0xf18] sm:$0xff]
        %v787 = vld [vmem:[#allocation5 + $0xf20] sm:$0xff]
        %v788 = vld [vmem:[#allocation5 + $0xf28] sm:$0xff]
        %v789 = vld [vmem:[#allocation5 + $0xf30] sm:$0xff]
        %v790 = vld [vmem:[#allocation5 + $0xf38] sm:$0xff]
        %v791 = vld [vmem:[#allocation5 + $0xf40] sm:$0xff]
        %v792 = vld [vmem:[#allocation5 + $0xf48] sm:$0xff]
        %v793 = vld [vmem:[#allocation5 + $0xf50] sm:$0xff]
        %v794 = vld [vmem:[#allocation5 + $0xf58] sm:$0xff]
        %v795 = vld [vmem:[#allocation5 + $0xf60] sm:$0xff]
        %v796 = vld [vmem:[#allocation5 + $0xf68] sm:$0xff]
        %v797 = vld [vmem:[#allocation5 + $0xf70] sm:$0xff]
        %v798 = vld [vmem:[#allocation5 + $0xf78] sm:$0xff]
        %v799 = vld [vmem:[#allocation5 + $0xf80] sm:$0xff]
        %v800 = vld [vmem:[#allocation5 + $0xf88] sm:$0xff]
        %v801 = vld [vmem:[#allocation5 + $0xf90] sm:$0xff]
        %v802 = vld [vmem:[#allocation5 + $0xf98] sm:$0xff]
        %v803 = vld [vmem:[#allocation5 + $0xfa0] sm:$0xff]
        %v804 = vld [vmem:[#allocation5 + $0xfa8] sm:$0xff]
        %v805 = vld [vmem:[#allocation5 + $0xfb0] sm:$0xff]
        %v806 = vld [vmem:[#allocation5 + $0xfb8] sm:$0xff]
        %v807 = vld [vmem:[#allocation5 + $0xfc0] sm:$0xff]
        %v808 = vld [vmem:[#allocation5 + $0xfc8] sm:$0xff]
        %v809 = vld [vmem:[#allocation5 + $0xfd0] sm:$0xff]
        %v810 = vld [vmem:[#allocation5 + $0xfd8] sm:$0xff]
        %v811 = vld [vmem:[#allocation5 + $0xfe0] sm:$0xff]
        %v812 = vld [vmem:[#allocation5 + $0xfe8] sm:$0xff]
        %v813 = vld [vmem:[#allocation5 + $0xff0] sm:$0xff]
        %v814 = vld [vmem:[#allocation5 + $0xff8] sm:$0xff]
        %v815 = vld [vmem:[#allocation7] sm:$0xf]
        %v817 = vlaneseq
        %v818 = vshrl.u32 %v817, 7
        %v819 = vsub.s32 0, %v818
        %v820 = vrot.slane %v815, %v819
        %v821 = vlaneseq
        %v822 = vshrl.u32 %v821, 7
        %v823 = vsub.s32 1, %v822
        %v824 = vrot.slane %v815, %v823
        %v825 = vlaneseq
        %v826 = vshrl.u32 %v825, 7
        %v827 = vsub.s32 2, %v826
        %v828 = vrot.slane %v815, %v827
        %v829 = vlaneseq
        %v830 = vshrl.u32 %v829, 7
        %v831 = vsub.s32 3, %v830
        %v832 = vrot.slane %v815, %v831
        %837 = vmatprep.subr.mxu0 %v364
        %838 = vmatpush1.msra.mxu0 %v363
        %839 = vmatprep.subr.mxu0 %v360
        %840 = vmatpush1.msra.mxu0 %v359
        %841 = vmatprep.subr.mxu0 %v356
        %842 = vmatpush1.msra.mxu0 %v355
        %843 = vmatprep.subr.mxu0 %v352
        %844 = vmatpush1.msra.mxu0 %v351
        %845 = vmatprep.subr.mxu0 %v348
        %846 = vmatpush1.msra.mxu0 %v347
        %847 = vmatprep.subr.mxu0 %v344
        %848 = vmatpush1.msra.mxu0 %v343
        %849 = vmatprep.subr.mxu0 %v340
        %850 = vmatpush1.msra.mxu0 %v339
        %851 = vmatprep.subr.mxu0 %v336
        %852 = vmatpush1.msra.mxu0 %v335
        %853 = vmatprep.subr.mxu0 %v332
        %854 = vmatpush1.msra.mxu0 %v331
        %855 = vmatprep.subr.mxu0 %v328
        %856 = vmatpush1.msra.mxu0 %v327
        %857 = vmatprep.subr.mxu0 %v324
        %858 = vmatpush1.msra.mxu0 %v323
        %859 = vmatprep.subr.mxu0 %v320
        %860 = vmatpush1.msra.mxu0 %v319
        %861 = vmatprep.subr.mxu0 %v316
        %862 = vmatpush1.msra.mxu0 %v315
        %863 = vmatprep.subr.mxu0 %v312
        %864 = vmatpush1.msra.mxu0 %v311
        %865 = vmatprep.subr.mxu0 %v308
        %866 = vmatpush1.msra.mxu0 %v307
        %867 = vmatprep.subr.mxu0 %v304
        %868 = vmatpush1.msra.mxu0 %v303
        %869 = vmatprep.subr.mxu0 %v428
        %870 = vmatpush2.msra.mxu0 %v427
        %871 = vmatprep.subr.mxu0 %v424
        %872 = vmatpush2.msra.mxu0 %v423
        %873 = vmatprep.subr.mxu0 %v420
        %874 = vmatpush2.msra.mxu0 %v419
        %875 = vmatprep.subr.mxu0 %v416
        %876 = vmatpush2.msra.mxu0 %v415
        %877 = vmatprep.subr.mxu0 %v412
        %878 = vmatpush2.msra.mxu0 %v411
        %879 = vmatprep.subr.mxu0 %v408
        %880 = vmatpush2.msra.mxu0 %v407
        %881 = vmatprep.subr.mxu0 %v404
        %882 = vmatpush2.msra.mxu0 %v403
        %883 = vmatprep.subr.mxu0 %v400
        %884 = vmatpush2.msra.mxu0 %v399
        %885 = vmatprep.subr.mxu0 %v396
        %886 = vmatpush2.msra.mxu0 %v395
        %887 = vmatprep.subr.mxu0 %v392
        %888 = vmatpush2.msra.mxu0 %v391
        %889 = vmatprep.subr.mxu0 %v388
        %890 = vmatpush2.msra.mxu0 %v387
        %891 = vmatprep.subr.mxu0 %v384
        %892 = vmatpush2.msra.mxu0 %v383
        %893 = vmatprep.subr.mxu0 %v380
        %894 = vmatpush2.msra.mxu0 %v379
        %895 = vmatprep.subr.mxu0 %v376
        %896 = vmatpush2.msra.mxu0 %v375
        %897 = vmatprep.subr.mxu0 %v372
        %898 = vmatpush2.msra.mxu0 %v371
        %899 = vmatprep.subr.mxu0 %v368
        %900 = vmatpush2.msra.mxu0 %v367
        %901 = vmatprep.mubr.f32.mxu0 %v296
        %902 = vmatmul.mubr.f32.gmra.mxu0 %v295
        %v903 = vpop.f32.mrf.mxu0
        %v904 = vadd.f32 %v820, %v903
        %v905 = vpop.f32.mrf.mxu0
        %v906 = vadd.f32 %v824, %v905
        %907 = vdwg.mxu0
        %908 = vmatprep.subr.mxu0 %v492
        %909 = vmatpush1.msra.mxu0 %v491
        %910 = vmatprep.subr.mxu0 %v488
        %911 = vmatpush1.msra.mxu0 %v487
        %912 = vmatprep.subr.mxu0 %v484
        %913 = vmatpush1.msra.mxu0 %v483
        %914 = vmatprep.subr.mxu0 %v480
        %915 = vmatpush1.msra.mxu0 %v479
        %916 = vmatprep.subr.mxu0 %v476
        %917 = vmatpush1.msra.mxu0 %v475
        %918 = vmatprep.subr.mxu0 %v472
        %919 = vmatpush1.msra.mxu0 %v471
        %920 = vmatprep.subr.mxu0 %v468
        %921 = vmatpush1.msra.mxu0 %v467
        %922 = vmatprep.subr.mxu0 %v464
        %923 = vmatpush1.msra.mxu0 %v463
        %924 = vmatprep.subr.mxu0 %v460
        %925 = vmatpush1.msra.mxu0 %v459
        %926 = vmatprep.subr.mxu0 %v456
        %927 = vmatpush1.msra.mxu0 %v455
        %928 = vmatprep.subr.mxu0 %v452
        %929 = vmatpush1.msra.mxu0 %v451
        %930 = vmatprep.subr.mxu0 %v448
        %931 = vmatpush1.msra.mxu0 %v447
        %932 = vmatprep.subr.mxu0 %v444
        %933 = vmatpush1.msra.mxu0 %v443
        %934 = vmatprep.subr.mxu0 %v440
        %935 = vmatpush1.msra.mxu0 %v439
        %936 = vmatprep.subr.mxu0 %v436
        %937 = vmatpush1.msra.mxu0 %v435
        %938 = vmatprep.subr.mxu0 %v432
        %939 = vmatpush1.msra.mxu0 %v431
        %940 = vmatprep.subr.mxu0 %v556
        %941 = vmatpush2.msra.mxu0 %v555
        %942 = vmatprep.subr.mxu0 %v552
        %943 = vmatpush2.msra.mxu0 %v551
        %944 = vmatprep.subr.mxu0 %v548
        %945 = vmatpush2.msra.mxu0 %v547
        %946 = vmatprep.subr.mxu0 %v544
        %947 = vmatpush2.msra.mxu0 %v543
        %948 = vmatprep.subr.mxu0 %v540
        %949 = vmatpush2.msra.mxu0 %v539
        %950 = vmatprep.subr.mxu0 %v536
        %951 = vmatpush2.msra.mxu0 %v535
        %952 = vmatprep.subr.mxu0 %v532
        %953 = vmatpush2.msra.mxu0 %v531
        %954 = vmatprep.subr.mxu0 %v528
        %955 = vmatpush2.msra.mxu0 %v527
        %956 = vmatprep.subr.mxu0 %v524
        %957 = vmatpush2.msra.mxu0 %v523
        %958 = vmatprep.subr.mxu0 %v520
        %959 = vmatpush2.msra.mxu0 %v519
        %960 = vmatprep.subr.mxu0 %v516
        %961 = vmatpush2.msra.mxu0 %v515
        %962 = vmatprep.subr.mxu0 %v512
        %963 = vmatpush2.msra.mxu0 %v511
        %964 = vmatprep.subr.mxu0 %v508
        %965 = vmatpush2.msra.mxu0 %v507
        %966 = vmatprep.subr.mxu0 %v504
        %967 = vmatpush2.msra.mxu0 %v503
        %968 = vmatprep.subr.mxu0 %v500
        %969 = vmatpush2.msra.mxu0 %v499
        %970 = vmatprep.subr.mxu0 %v496
        %971 = vmatpush2.msra.mxu0 %v495
        %972 = vmatprep.mubr.f32.mxu0 %v298
        %973 = vmatmul.mubr.f32.gmra.mxu0 %v297
        %v974 = vpop.f32.mrf.mxu0
        %v975 = vadd.f32 %v904, %v974
        %v976 = vpop.f32.mrf.mxu0
        %v977 = vadd.f32 %v906, %v976
        %978 = vdwg.mxu0
        %979 = vmatprep.subr.mxu0 %v620
        %980 = vmatpush1.msra.mxu0 %v619
        %981 = vmatprep.subr.mxu0 %v616
        %982 = vmatpush1.msra.mxu0 %v615
        %983 = vmatprep.subr.mxu0 %v612
        %984 = vmatpush1.msra.mxu0 %v611
        %985 = vmatprep.subr.mxu0 %v608
        %986 = vmatpush1.msra.mxu0 %v607
        %987 = vmatprep.subr.mxu0 %v604
        %988 = vmatpush1.msra.mxu0 %v603
        %989 = vmatprep.subr.mxu0 %v600
        %990 = vmatpush1.msra.mxu0 %v599
        %991 = vmatprep.subr.mxu0 %v596
        %992 = vmatpush1.msra.mxu0 %v595
        %993 = vmatprep.subr.mxu0 %v592
        %994 = vmatpush1.msra.mxu0 %v591
        %995 = vmatprep.subr.mxu0 %v588
        %996 = vmatpush1.msra.mxu0 %v587
        %997 = vmatprep.subr.mxu0 %v584
        %998 = vmatpush1.msra.mxu0 %v583
        %999 = vmatprep.subr.mxu0 %v580
        %1000 = vmatpush1.msra.mxu0 %v579
        %1001 = vmatprep.subr.mxu0 %v576
        %1002 = vmatpush1.msra.mxu0 %v575
        %1003 = vmatprep.subr.mxu0 %v572
        %1004 = vmatpush1.msra.mxu0 %v571
        %1005 = vmatprep.subr.mxu0 %v568
        %1006 = vmatpush1.msra.mxu0 %v567
        %1007 = vmatprep.subr.mxu0 %v564
        %1008 = vmatpush1.msra.mxu0 %v563
        %1009 = vmatprep.subr.mxu0 %v560
        %1010 = vmatpush1.msra.mxu0 %v559
        %1011 = vmatprep.subr.mxu0 %v684
        %1012 = vmatpush2.msra.mxu0 %v683
        %1013 = vmatprep.subr.mxu0 %v680
        %1014 = vmatpush2.msra.mxu0 %v679
        %1015 = vmatprep.subr.mxu0 %v676
        %1016 = vmatpush2.msra.mxu0 %v675
        %1017 = vmatprep.subr.mxu0 %v672
        %1018 = vmatpush2.msra.mxu0 %v671
        %1019 = vmatprep.subr.mxu0 %v668
        %1020 = vmatpush2.msra.mxu0 %v667
        %1021 = vmatprep.subr.mxu0 %v664
        %1022 = vmatpush2.msra.mxu0 %v663
        %1023 = vmatprep.subr.mxu0 %v660
        %1024 = vmatpush2.msra.mxu0 %v659
        %1025 = vmatprep.subr.mxu0 %v656
        %1026 = vmatpush2.msra.mxu0 %v655
        %1027 = vmatprep.subr.mxu0 %v652
        %1028 = vmatpush2.msra.mxu0 %v651
        %1029 = vmatprep.subr.mxu0 %v648
        %1030 = vmatpush2.msra.mxu0 %v647
        %1031 = vmatprep.subr.mxu0 %v644
        %1032 = vmatpush2.msra.mxu0 %v643
        %1033 = vmatprep.subr.mxu0 %v640
        %1034 = vmatpush2.msra.mxu0 %v639
        %1035 = vmatprep.subr.mxu0 %v636
        %1036 = vmatpush2.msra.mxu0 %v635
        %1037 = vmatprep.subr.mxu0 %v632
        %1038 = vmatpush2.msra.mxu0 %v631
        %1039 = vmatprep.subr.mxu0 %v628
        %1040 = vmatpush2.msra.mxu0 %v627
        %1041 = vmatprep.subr.mxu0 %v624
        %1042 = vmatpush2.msra.mxu0 %v623
        %1043 = vmatprep.mubr.f32.mxu0 %v300
        %1044 = vmatmul.mubr.f32.gmra.mxu0 %v299
        %v1045 = vpop.f32.mrf.mxu0
        %v1046 = vadd.f32 %v975, %v1045
        %v1047 = vpop.f32.mrf.mxu0
        %v1048 = vadd.f32 %v977, %v1047
        %1049 = vdwg.mxu0
        %1050 = vmatprep.subr.mxu0 %v748
        %1051 = vmatpush1.msra.mxu0 %v747
        %1052 = vmatprep.subr.mxu0 %v744
        %1053 = vmatpush1.msra.mxu0 %v743
        %1054 = vmatprep.subr.mxu0 %v740
        %1055 = vmatpush1.msra.mxu0 %v739
        %1056 = vmatprep.subr.mxu0 %v736
        %1057 = vmatpush1.msra.mxu0 %v735
        %1058 = vmatprep.subr.mxu0 %v732
        %1059 = vmatpush1.msra.mxu0 %v731
        %1060 = vmatprep.subr.mxu0 %v728
        %1061 = vmatpush1.msra.mxu0 %v727
        %1062 = vmatprep.subr.mxu0 %v724
        %1063 = vmatpush1.msra.mxu0 %v723
        %1064 = vmatprep.subr.mxu0 %v720
        %1065 = vmatpush1.msra.mxu0 %v719
        %1066 = vmatprep.subr.mxu0 %v716
        %1067 = vmatpush1.msra.mxu0 %v715
        %1068 = vmatprep.subr.mxu0 %v712
        %1069 = vmatpush1.msra.mxu0 %v711
        %1070 = vmatprep.subr.mxu0 %v708
        %1071 = vmatpush1.msra.mxu0 %v707
        %1072 = vmatprep.subr.mxu0 %v704
        %1073 = vmatpush1.msra.mxu0 %v703
        %1074 = vmatprep.subr.mxu0 %v700
        %1075 = vmatpush1.msra.mxu0 %v699
        %1076 = vmatprep.subr.mxu0 %v696
        %1077 = vmatpush1.msra.mxu0 %v695
        %1078 = vmatprep.subr.mxu0 %v692
        %1079 = vmatpush1.msra.mxu0 %v691
        %1080 = vmatprep.subr.mxu0 %v688
        %1081 = vmatpush1.msra.mxu0 %v687
        %1082 = vmatprep.subr.mxu0 %v812
        %1083 = vmatpush2.msra.mxu0 %v811
        %1084 = vmatprep.subr.mxu0 %v808
        %1085 = vmatpush2.msra.mxu0 %v807
        %1086 = vmatprep.subr.mxu0 %v804
        %1087 = vmatpush2.msra.mxu0 %v803
        %1088 = vmatprep.subr.mxu0 %v800
        %1089 = vmatpush2.msra.mxu0 %v799
        %1090 = vmatprep.subr.mxu0 %v796
        %1091 = vmatpush2.msra.mxu0 %v795
        %1092 = vmatprep.subr.mxu0 %v792
        %1093 = vmatpush2.msra.mxu0 %v791
        %1094 = vmatprep.subr.mxu0 %v788
        %1095 = vmatpush2.msra.mxu0 %v787
        %1096 = vmatprep.subr.mxu0 %v784
        %1097 = vmatpush2.msra.mxu0 %v783
        %1098 = vmatprep.subr.mxu0 %v780
        %1099 = vmatpush2.msra.mxu0 %v779
        %1100 = vmatprep.subr.mxu0 %v776
        %1101 = vmatpush2.msra.mxu0 %v775
        %1102 = vmatprep.subr.mxu0 %v772
        %1103 = vmatpush2.msra.mxu0 %v771
        %1104 = vmatprep.subr.mxu0 %v768
        %1105 = vmatpush2.msra.mxu0 %v767
        %1106 = vmatprep.subr.mxu0 %v764
        %1107 = vmatpush2.msra.mxu0 %v763
        %1108 = vmatprep.subr.mxu0 %v760
        %1109 = vmatpush2.msra.mxu0 %v759
        %1110 = vmatprep.subr.mxu0 %v756
        %1111 = vmatpush2.msra.mxu0 %v755
        %1112 = vmatprep.subr.mxu0 %v752
        %1113 = vmatpush2.msra.mxu0 %v751
        %1114 = vmatprep.mubr.f32.mxu0 %v302
        %1115 = vmatmul.mubr.f32.gmra.mxu0 %v301
        %v1116 = vpop.f32.mrf.mxu0
        %v1117 = vadd.f32 %v1046, %v1116
        %v1118 = vpop.f32.mrf.mxu0
        %v1119 = vadd.f32 %v1048, %v1118
        %1120 = vdwg.mxu0
        %1121 = vmatprep.subr.mxu0 %v366
        %1122 = vmatpush1.msra.mxu0 %v365
        %1123 = vmatprep.subr.mxu0 %v362
        %1124 = vmatpush1.msra.mxu0 %v361
        %1125 = vmatprep.subr.mxu0 %v358
        %1126 = vmatpush1.msra.mxu0 %v357
        %1127 = vmatprep.subr.mxu0 %v354
        %1128 = vmatpush1.msra.mxu0 %v353
        %1129 = vmatprep.subr.mxu0 %v350
        %1130 = vmatpush1.msra.mxu0 %v349
        %1131 = vmatprep.subr.mxu0 %v346
        %1132 = vmatpush1.msra.mxu0 %v345
        %1133 = vmatprep.subr.mxu0 %v342
        %1134 = vmatpush1.msra.mxu0 %v341
        %1135 = vmatprep.subr.mxu0 %v338
        %1136 = vmatpush1.msra.mxu0 %v337
        %1137 = vmatprep.subr.mxu0 %v334
        %1138 = vmatpush1.msra.mxu0 %v333
        %1139 = vmatprep.subr.mxu0 %v330
        %1140 = vmatpush1.msra.mxu0 %v329
        %1141 = vmatprep.subr.mxu0 %v326
        %1142 = vmatpush1.msra.mxu0 %v325
        %1143 = vmatprep.subr.mxu0 %v322
        %1144 = vmatpush1.msra.mxu0 %v321
        %1145 = vmatprep.subr.mxu0 %v318
        %1146 = vmatpush1.msra.mxu0 %v317
        %1147 = vmatprep.subr.mxu0 %v314
        %1148 = vmatpush1.msra.mxu0 %v313
        %1149 = vmatprep.subr.mxu0 %v310
        %1150 = vmatpush1.msra.mxu0 %v309
        %1151 = vmatprep.subr.mxu0 %v306
        %1152 = vmatpush1.msra.mxu0 %v305
        %1153 = vmatprep.subr.mxu0 %v430
        %1154 = vmatpush2.msra.mxu0 %v429
        %1155 = vmatprep.subr.mxu0 %v426
        %1156 = vmatpush2.msra.mxu0 %v425
        %1157 = vmatprep.subr.mxu0 %v422
        %1158 = vmatpush2.msra.mxu0 %v421
        %1159 = vmatprep.subr.mxu0 %v418
        %1160 = vmatpush2.msra.mxu0 %v417
        %1161 = vmatprep.subr.mxu0 %v414
        %1162 = vmatpush2.msra.mxu0 %v413
        %1163 = vmatprep.subr.mxu0 %v410
        %1164 = vmatpush2.msra.mxu0 %v409
        %1165 = vmatprep.subr.mxu0 %v406
        %1166 = vmatpush2.msra.mxu0 %v405
        %1167 = vmatprep.subr.mxu0 %v402
        %1168 = vmatpush2.msra.mxu0 %v401
        %1169 = vmatprep.subr.mxu0 %v398
        %1170 = vmatpush2.msra.mxu0 %v397
        %1171 = vmatprep.subr.mxu0 %v394
        %1172 = vmatpush2.msra.mxu0 %v393
        %1173 = vmatprep.subr.mxu0 %v390
        %1174 = vmatpush2.msra.mxu0 %v389
        %1175 = vmatprep.subr.mxu0 %v386
        %1176 = vmatpush2.msra.mxu0 %v385
        %1177 = vmatprep.subr.mxu0 %v382
        %1178 = vmatpush2.msra.mxu0 %v381
        %1179 = vmatprep.subr.mxu0 %v378
        %1180 = vmatpush2.msra.mxu0 %v377
        %1181 = vmatprep.subr.mxu0 %v374
        %1182 = vmatpush2.msra.mxu0 %v373
        %1183 = vmatprep.subr.mxu0 %v370
        %1184 = vmatpush2.msra.mxu0 %v369
        %1185 = vmatprep.mubr.f32.mxu0 %v296
        %1186 = vmatmul.mubr.f32.gmra.mxu0 %v295
        %v1187 = vpop.f32.mrf.mxu0
        %v1188 = vadd.f32 %v828, %v1187
        %v1189 = vpop.f32.mrf.mxu0
        %v1190 = vadd.f32 %v832, %v1189
        %1191 = vdwg.mxu0
        %1192 = vmatprep.subr.mxu0 %v494
        %1193 = vmatpush1.msra.mxu0 %v493
        %1194 = vmatprep.subr.mxu0 %v490
        %1195 = vmatpush1.msra.mxu0 %v489
        %1196 = vmatprep.subr.mxu0 %v486
        %1197 = vmatpush1.msra.mxu0 %v485
        %1198 = vmatprep.subr.mxu0 %v482
        %1199 = vmatpush1.msra.mxu0 %v481
        %1200 = vmatprep.subr.mxu0 %v478
        %1201 = vmatpush1.msra.mxu0 %v477
        %1202 = vmatprep.subr.mxu0 %v474
        %1203 = vmatpush1.msra.mxu0 %v473
        %1204 = vmatprep.subr.mxu0 %v470
        %1205 = vmatpush1.msra.mxu0 %v469
        %1206 = vmatprep.subr.mxu0 %v466
        %1207 = vmatpush1.msra.mxu0 %v465
        %1208 = vmatprep.subr.mxu0 %v462
        %1209 = vmatpush1.msra.mxu0 %v461
        %1210 = vmatprep.subr.mxu0 %v458
        %1211 = vmatpush1.msra.mxu0 %v457
        %1212 = vmatprep.subr.mxu0 %v454
        %1213 = vmatpush1.msra.mxu0 %v453
        %1214 = vmatprep.subr.mxu0 %v450
        %1215 = vmatpush1.msra.mxu0 %v449
        %1216 = vmatprep.subr.mxu0 %v446
        %1217 = vmatpush1.msra.mxu0 %v445
        %1218 = vmatprep.subr.mxu0 %v442
        %1219 = vmatpush1.msra.mxu0 %v441
        %1220 = vmatprep.subr.mxu0 %v438
        %1221 = vmatpush1.msra.mxu0 %v437
        %1222 = vmatprep.subr.mxu0 %v434
        %1223 = vmatpush1.msra.mxu0 %v433
        %1224 = vmatprep.subr.mxu0 %v558
        %1225 = vmatpush2.msra.mxu0 %v557
        %1226 = vmatprep.subr.mxu0 %v554
        %1227 = vmatpush2.msra.mxu0 %v553
        %1228 = vmatprep.subr.mxu0 %v550
        %1229 = vmatpush2.msra.mxu0 %v549
        %1230 = vmatprep.subr.mxu0 %v546
        %1231 = vmatpush2.msra.mxu0 %v545
        %1232 = vmatprep.subr.mxu0 %v542
        %1233 = vmatpush2.msra.mxu0 %v541
        %1234 = vmatprep.subr.mxu0 %v538
        %1235 = vmatpush2.msra.mxu0 %v537
        %1236 = vmatprep.subr.mxu0 %v534
        %1237 = vmatpush2.msra.mxu0 %v533
        %1238 = vmatprep.subr.mxu0 %v530
        %1239 = vmatpush2.msra.mxu0 %v529
        %1240 = vmatprep.subr.mxu0 %v526
        %1241 = vmatpush2.msra.mxu0 %v525
        %1242 = vmatprep.subr.mxu0 %v522
        %1243 = vmatpush2.msra.mxu0 %v521
        %1244 = vmatprep.subr.mxu0 %v518
        %1245 = vmatpush2.msra.mxu0 %v517
        %1246 = vmatprep.subr.mxu0 %v514
        %1247 = vmatpush2.msra.mxu0 %v513
        %1248 = vmatprep.subr.mxu0 %v510
        %1249 = vmatpush2.msra.mxu0 %v509
        %1250 = vmatprep.subr.mxu0 %v506
        %1251 = vmatpush2.msra.mxu0 %v505
        %1252 = vmatprep.subr.mxu0 %v502
        %1253 = vmatpush2.msra.mxu0 %v501
        %1254 = vmatprep.subr.mxu0 %v498
        %1255 = vmatpush2.msra.mxu0 %v497
        %1256 = vmatprep.mubr.f32.mxu0 %v298
        %1257 = vmatmul.mubr.f32.gmra.mxu0 %v297
        %v1258 = vpop.f32.mrf.mxu0
        %v1259 = vadd.f32 %v1188, %v1258
        %v1260 = vpop.f32.mrf.mxu0
        %v1261 = vadd.f32 %v1190, %v1260
        %1262 = vdwg.mxu0
        %1263 = vmatprep.subr.mxu0 %v622
        %1264 = vmatpush1.msra.mxu0 %v621
        %1265 = vmatprep.subr.mxu0 %v618
        %1266 = vmatpush1.msra.mxu0 %v617
        %1267 = vmatprep.subr.mxu0 %v614
        %1268 = vmatpush1.msra.mxu0 %v613
        %1269 = vmatprep.subr.mxu0 %v610
        %1270 = vmatpush1.msra.mxu0 %v609
        %1271 = vmatprep.subr.mxu0 %v606
        %1272 = vmatpush1.msra.mxu0 %v605
        %1273 = vmatprep.subr.mxu0 %v602
        %1274 = vmatpush1.msra.mxu0 %v601
        %1275 = vmatprep.subr.mxu0 %v598
        %1276 = vmatpush1.msra.mxu0 %v597
        %1277 = vmatprep.subr.mxu0 %v594
        %1278 = vmatpush1.msra.mxu0 %v593
        %1279 = vmatprep.subr.mxu0 %v590
        %1280 = vmatpush1.msra.mxu0 %v589
        %1281 = vmatprep.subr.mxu0 %v586
        %1282 = vmatpush1.msra.mxu0 %v585
        %1283 = vmatprep.subr.mxu0 %v582
        %1284 = vmatpush1.msra.mxu0 %v581
        %1285 = vmatprep.subr.mxu0 %v578
        %1286 = vmatpush1.msra.mxu0 %v577
        %1287 = vmatprep.subr.mxu0 %v574
        %1288 = vmatpush1.msra.mxu0 %v573
        %1289 = vmatprep.subr.mxu0 %v570
        %1290 = vmatpush1.msra.mxu0 %v569
        %1291 = vmatprep.subr.mxu0 %v566
        %1292 = vmatpush1.msra.mxu0 %v565
        %1293 = vmatprep.subr.mxu0 %v562
        %1294 = vmatpush1.msra.mxu0 %v561
        %1295 = vmatprep.subr.mxu0 %v686
        %1296 = vmatpush2.msra.mxu0 %v685
        %1297 = vmatprep.subr.mxu0 %v682
        %1298 = vmatpush2.msra.mxu0 %v681
        %1299 = vmatprep.subr.mxu0 %v678
        %1300 = vmatpush2.msra.mxu0 %v677
        %1301 = vmatprep.subr.mxu0 %v674
        %1302 = vmatpush2.msra.mxu0 %v673
        %1303 = vmatprep.subr.mxu0 %v670
        %1304 = vmatpush2.msra.mxu0 %v669
        %1305 = vmatprep.subr.mxu0 %v666
        %1306 = vmatpush2.msra.mxu0 %v665
        %1307 = vmatprep.subr.mxu0 %v662
        %1308 = vmatpush2.msra.mxu0 %v661
        %1309 = vmatprep.subr.mxu0 %v658
        %1310 = vmatpush2.msra.mxu0 %v657
        %1311 = vmatprep.subr.mxu0 %v654
        %1312 = vmatpush2.msra.mxu0 %v653
        %1313 = vmatprep.subr.mxu0 %v650
        %1314 = vmatpush2.msra.mxu0 %v649
        %1315 = vmatprep.subr.mxu0 %v646
        %1316 = vmatpush2.msra.mxu0 %v645
        %1317 = vmatprep.subr.mxu0 %v642
        %1318 = vmatpush2.msra.mxu0 %v641
        %1319 = vmatprep.subr.mxu0 %v638
        %1320 = vmatpush2.msra.mxu0 %v637
        %1321 = vmatprep.subr.mxu0 %v634
        %1322 = vmatpush2.msra.mxu0 %v633
        %1323 = vmatprep.subr.mxu0 %v630
        %1324 = vmatpush2.msra.mxu0 %v629
        %1325 = vmatprep.subr.mxu0 %v626
        %1326 = vmatpush2.msra.mxu0 %v625
        %1327 = vmatprep.mubr.f32.mxu0 %v300
        %1328 = vmatmul.mubr.f32.gmra.mxu0 %v299
        %v1329 = vpop.f32.mrf.mxu0
        %v1330 = vadd.f32 %v1259, %v1329
        %v1331 = vpop.f32.mrf.mxu0
        %v1332 = vadd.f32 %v1261, %v1331
        %1333 = vdwg.mxu0
        %1334 = vmatprep.subr.mxu0 %v750
        %1335 = vmatpush1.msra.mxu0 %v749
        %1336 = vmatprep.subr.mxu0 %v746
        %1337 = vmatpush1.msra.mxu0 %v745
        %1338 = vmatprep.subr.mxu0 %v742
        %1339 = vmatpush1.msra.mxu0 %v741
        %1340 = vmatprep.subr.mxu0 %v738
        %1341 = vmatpush1.msra.mxu0 %v737
        %1342 = vmatprep.subr.mxu0 %v734
        %1343 = vmatpush1.msra.mxu0 %v733
        %1344 = vmatprep.subr.mxu0 %v730
        %1345 = vmatpush1.msra.mxu0 %v729
        %1346 = vmatprep.subr.mxu0 %v726
        %1347 = vmatpush1.msra.mxu0 %v725
        %1348 = vmatprep.subr.mxu0 %v722
        %1349 = vmatpush1.msra.mxu0 %v721
        %1350 = vmatprep.subr.mxu0 %v718
        %1351 = vmatpush1.msra.mxu0 %v717
        %1352 = vmatprep.subr.mxu0 %v714
        %1353 = vmatpush1.msra.mxu0 %v713
        %1354 = vmatprep.subr.mxu0 %v710
        %1355 = vmatpush1.msra.mxu0 %v709
        %1356 = vmatprep.subr.mxu0 %v706
        %1357 = vmatpush1.msra.mxu0 %v705
        %1358 = vmatprep.subr.mxu0 %v702
        %1359 = vmatpush1.msra.mxu0 %v701
        %1360 = vmatprep.subr.mxu0 %v698
        %1361 = vmatpush1.msra.mxu0 %v697
        %1362 = vmatprep.subr.mxu0 %v694
        %1363 = vmatpush1.msra.mxu0 %v693
        %1364 = vmatprep.subr.mxu0 %v690
        %1365 = vmatpush1.msra.mxu0 %v689
        %1366 = vmatprep.subr.mxu0 %v814
        %1367 = vmatpush2.msra.mxu0 %v813
        %1368 = vmatprep.subr.mxu0 %v810
        %1369 = vmatpush2.msra.mxu0 %v809
        %1370 = vmatprep.subr.mxu0 %v806
        %1371 = vmatpush2.msra.mxu0 %v805
        %1372 = vmatprep.subr.mxu0 %v802
        %1373 = vmatpush2.msra.mxu0 %v801
        %1374 = vmatprep.subr.mxu0 %v798
        %1375 = vmatpush2.msra.mxu0 %v797
        %1376 = vmatprep.subr.mxu0 %v794
        %1377 = vmatpush2.msra.mxu0 %v793
        %1378 = vmatprep.subr.mxu0 %v790
        %1379 = vmatpush2.msra.mxu0 %v789
        %1380 = vmatprep.subr.mxu0 %v786
        %1381 = vmatpush2.msra.mxu0 %v785
        %1382 = vmatprep.subr.mxu0 %v782
        %1383 = vmatpush2.msra.mxu0 %v781
        %1384 = vmatprep.subr.mxu0 %v778
        %1385 = vmatpush2.msra.mxu0 %v777
        %1386 = vmatprep.subr.mxu0 %v774
        %1387 = vmatpush2.msra.mxu0 %v773
        %1388 = vmatprep.subr.mxu0 %v770
        %1389 = vmatpush2.msra.mxu0 %v769
        %1390 = vmatprep.subr.mxu0 %v766
        %1391 = vmatpush2.msra.mxu0 %v765
        %1392 = vmatprep.subr.mxu0 %v762
        %1393 = vmatpush2.msra.mxu0 %v761
        %1394 = vmatprep.subr.mxu0 %v758
        %1395 = vmatpush2.msra.mxu0 %v757
        %1396 = vmatprep.subr.mxu0 %v754
        %1397 = vmatpush2.msra.mxu0 %v753
        %1398 = vmatprep.mubr.f32.mxu0 %v302
        %1399 = vmatmul.mubr.f32.gmra.mxu0 %v301
        %v1400 = vpop.f32.mrf.mxu0
        %v1401 = vadd.f32 %v1330, %v1400
        %v1402 = vpop.f32.mrf.mxu0
        %v1403 = vadd.f32 %v1332, %v1402
        %1404 = vdwg.mxu0
        %v1405 = vmul.f32 %v1117, 0.5
        %v1406 = vmul.f32 %v1119, 0.5
        %v1407 = vmul.f32 %v1401, 0.5
        %v1408 = vmul.f32 %v1403, 0.5
        %v1409 = vmul.f32 %v1117, 0.70710677
        %v1410 = vmul.f32 %v1119, 0.70710677
        %v1411 = vmul.f32 %v1401, 0.70710677
        %v1412 = vmul.f32 %v1403, 0.70710677
        %v1413 = verf.f32.pop %v1409
        %v1414 = verf.f32.pop %v1410
        %v1415 = verf.f32.pop %v1411
        %v1416 = verf.f32.pop %v1412
        %v1417 = vadd.f32 %v1413, 1.0
        %v1418 = vadd.f32 %v1414, 1.0
        %v1419 = vadd.f32 %v1415, 1.0
        %v1420 = vadd.f32 %v1416, 1.0
        %v1421 = vmul.f32 %v1405, %v1417
        %v1422 = vmul.f32 %v1406, %v1418
        %v1423 = vmul.f32 %v1407, %v1419
        %v1424 = vmul.f32 %v1408, %v1420
        %v1425 = vld [vmem:[#allocation8] sm:$0xff]
        %v1426 = vld [vmem:[#allocation8 + $0x8] sm:$0xff]
        %v1427 = vld [vmem:[#allocation8 + $0x10] sm:$0xff]
        %v1428 = vld [vmem:[#allocation8 + $0x18] sm:$0xff]
        %v1429 = vld [vmem:[#allocation8 + $0x20] sm:$0xff]
        %v1430 = vld [vmem:[#allocation8 + $0x28] sm:$0xff]
        %v1431 = vld [vmem:[#allocation8 + $0x30] sm:$0xff]
        %v1432 = vld [vmem:[#allocation8 + $0x38] sm:$0xff]
        %v1433 = vld [vmem:[#allocation8 + $0x40] sm:$0xff]
        %v1434 = vld [vmem:[#allocation8 + $0x48] sm:$0xff]
        %v1435 = vld [vmem:[#allocation8 + $0x50] sm:$0xff]
        %v1436 = vld [vmem:[#allocation8 + $0x58] sm:$0xff]
        %v1437 = vld [vmem:[#allocation8 + $0x60] sm:$0xff]
        %v1438 = vld [vmem:[#allocation8 + $0x68] sm:$0xff]
        %v1439 = vld [vmem:[#allocation8 + $0x70] sm:$0xff]
        %v1440 = vld [vmem:[#allocation8 + $0x78] sm:$0xff]
        %v1441 = vld [vmem:[#allocation8 + $0x80] sm:$0xff]
        %v1442 = vld [vmem:[#allocation8 + $0x88] sm:$0xff]
        %v1443 = vld [vmem:[#allocation8 + $0x90] sm:$0xff]
        %v1444 = vld [vmem:[#allocation8 + $0x98] sm:$0xff]
        %v1445 = vld [vmem:[#allocation8 + $0xa0] sm:$0xff]
        %v1446 = vld [vmem:[#allocation8 + $0xa8] sm:$0xff]
        %v1447 = vld [vmem:[#allocation8 + $0xb0] sm:$0xff]
        %v1448 = vld [vmem:[#allocation8 + $0xb8] sm:$0xff]
        %v1449 = vld [vmem:[#allocation8 + $0xc0] sm:$0xff]
        %v1450 = vld [vmem:[#allocation8 + $0xc8] sm:$0xff]
        %v1451 = vld [vmem:[#allocation8 + $0xd0] sm:$0xff]
        %v1452 = vld [vmem:[#allocation8 + $0xd8] sm:$0xff]
        %v1453 = vld [vmem:[#allocation8 + $0xe0] sm:$0xff]
        %v1454 = vld [vmem:[#allocation8 + $0xe8] sm:$0xff]
        %v1455 = vld [vmem:[#allocation8 + $0xf0] sm:$0xff]
        %v1456 = vld [vmem:[#allocation8 + $0xf8] sm:$0xff]
        %v1457 = vld [vmem:[#allocation8 + $0x100] sm:$0xff]
        %v1458 = vld [vmem:[#allocation8 + $0x108] sm:$0xff]
        %v1459 = vld [vmem:[#allocation8 + $0x110] sm:$0xff]
        %v1460 = vld [vmem:[#allocation8 + $0x118] sm:$0xff]
        %v1461 = vld [vmem:[#allocation8 + $0x120] sm:$0xff]
        %v1462 = vld [vmem:[#allocation8 + $0x128] sm:$0xff]
        %v1463 = vld [vmem:[#allocation8 + $0x130] sm:$0xff]
        %v1464 = vld [vmem:[#allocation8 + $0x138] sm:$0xff]
        %v1465 = vld [vmem:[#allocation8 + $0x140] sm:$0xff]
        %v1466 = vld [vmem:[#allocation8 + $0x148] sm:$0xff]
        %v1467 = vld [vmem:[#allocation8 + $0x150] sm:$0xff]
        %v1468 = vld [vmem:[#allocation8 + $0x158] sm:$0xff]
        %v1469 = vld [vmem:[#allocation8 + $0x160] sm:$0xff]
        %v1470 = vld [vmem:[#allocation8 + $0x168] sm:$0xff]
        %v1471 = vld [vmem:[#allocation8 + $0x170] sm:$0xff]
        %v1472 = vld [vmem:[#allocation8 + $0x178] sm:$0xff]
        %v1473 = vld [vmem:[#allocation8 + $0x180] sm:$0xff]
        %v1474 = vld [vmem:[#allocation8 + $0x188] sm:$0xff]
        %v1475 = vld [vmem:[#allocation8 + $0x190] sm:$0xff]
        %v1476 = vld [vmem:[#allocation8 + $0x198] sm:$0xff]
        %v1477 = vld [vmem:[#allocation8 + $0x1a0] sm:$0xff]
        %v1478 = vld [vmem:[#allocation8 + $0x1a8] sm:$0xff]
        %v1479 = vld [vmem:[#allocation8 + $0x1b0] sm:$0xff]
        %v1480 = vld [vmem:[#allocation8 + $0x1b8] sm:$0xff]
        %v1481 = vld [vmem:[#allocation8 + $0x1c0] sm:$0xff]
        %v1482 = vld [vmem:[#allocation8 + $0x1c8] sm:$0xff]
        %v1483 = vld [vmem:[#allocation8 + $0x1d0] sm:$0xff]
        %v1484 = vld [vmem:[#allocation8 + $0x1d8] sm:$0xff]
        %v1485 = vld [vmem:[#allocation8 + $0x1e0] sm:$0xff]
        %v1486 = vld [vmem:[#allocation8 + $0x1e8] sm:$0xff]
        %v1487 = vld [vmem:[#allocation8 + $0x1f0] sm:$0xff]
        %v1488 = vld [vmem:[#allocation8 + $0x1f8] sm:$0xff]
        %v1489 = vld [vmem:[#allocation8 + $0x200] sm:$0xff]
        %v1490 = vld [vmem:[#allocation8 + $0x208] sm:$0xff]
        %v1491 = vld [vmem:[#allocation8 + $0x210] sm:$0xff]
        %v1492 = vld [vmem:[#allocation8 + $0x218] sm:$0xff]
        %v1493 = vld [vmem:[#allocation8 + $0x220] sm:$0xff]
        %v1494 = vld [vmem:[#allocation8 + $0x228] sm:$0xff]
        %v1495 = vld [vmem:[#allocation8 + $0x230] sm:$0xff]
        %v1496 = vld [vmem:[#allocation8 + $0x238] sm:$0xff]
        %v1497 = vld [vmem:[#allocation8 + $0x240] sm:$0xff]
        %v1498 = vld [vmem:[#allocation8 + $0x248] sm:$0xff]
        %v1499 = vld [vmem:[#allocation8 + $0x250] sm:$0xff]
        %v1500 = vld [vmem:[#allocation8 + $0x258] sm:$0xff]
        %v1501 = vld [vmem:[#allocation8 + $0x260] sm:$0xff]
        %v1502 = vld [vmem:[#allocation8 + $0x268] sm:$0xff]
        %v1503 = vld [vmem:[#allocation8 + $0x270] sm:$0xff]
        %v1504 = vld [vmem:[#allocation8 + $0x278] sm:$0xff]
        %v1505 = vld [vmem:[#allocation8 + $0x280] sm:$0xff]
        %v1506 = vld [vmem:[#allocation8 + $0x288] sm:$0xff]
        %v1507 = vld [vmem:[#allocation8 + $0x290] sm:$0xff]
        %v1508 = vld [vmem:[#allocation8 + $0x298] sm:$0xff]
        %v1509 = vld [vmem:[#allocation8 + $0x2a0] sm:$0xff]
        %v1510 = vld [vmem:[#allocation8 + $0x2a8] sm:$0xff]
        %v1511 = vld [vmem:[#allocation8 + $0x2b0] sm:$0xff]
        %v1512 = vld [vmem:[#allocation8 + $0x2b8] sm:$0xff]
        %v1513 = vld [vmem:[#allocation8 + $0x2c0] sm:$0xff]
        %v1514 = vld [vmem:[#allocation8 + $0x2c8] sm:$0xff]
        %v1515 = vld [vmem:[#allocation8 + $0x2d0] sm:$0xff]
        %v1516 = vld [vmem:[#allocation8 + $0x2d8] sm:$0xff]
        %v1517 = vld [vmem:[#allocation8 + $0x2e0] sm:$0xff]
        %v1518 = vld [vmem:[#allocation8 + $0x2e8] sm:$0xff]
        %v1519 = vld [vmem:[#allocation8 + $0x2f0] sm:$0xff]
        %v1520 = vld [vmem:[#allocation8 + $0x2f8] sm:$0xff]
        %v1521 = vld [vmem:[#allocation8 + $0x300] sm:$0xff]
        %v1522 = vld [vmem:[#allocation8 + $0x308] sm:$0xff]
        %v1523 = vld [vmem:[#allocation8 + $0x310] sm:$0xff]
        %v1524 = vld [vmem:[#allocation8 + $0x318] sm:$0xff]
        %v1525 = vld [vmem:[#allocation8 + $0x320] sm:$0xff]
        %v1526 = vld [vmem:[#allocation8 + $0x328] sm:$0xff]
        %v1527 = vld [vmem:[#allocation8 + $0x330] sm:$0xff]
        %v1528 = vld [vmem:[#allocation8 + $0x338] sm:$0xff]
        %v1529 = vld [vmem:[#allocation8 + $0x340] sm:$0xff]
        %v1530 = vld [vmem:[#allocation8 + $0x348] sm:$0xff]
        %v1531 = vld [vmem:[#allocation8 + $0x350] sm:$0xff]
        %v1532 = vld [vmem:[#allocation8 + $0x358] sm:$0xff]
        %v1533 = vld [vmem:[#allocation8 + $0x360] sm:$0xff]
        %v1534 = vld [vmem:[#allocation8 + $0x368] sm:$0xff]
        %v1535 = vld [vmem:[#allocation8 + $0x370] sm:$0xff]
        %v1536 = vld [vmem:[#allocation8 + $0x378] sm:$0xff]
        %v1537 = vld [vmem:[#allocation8 + $0x380] sm:$0xff]
        %v1538 = vld [vmem:[#allocation8 + $0x388] sm:$0xff]
        %v1539 = vld [vmem:[#allocation8 + $0x390] sm:$0xff]
        %v1540 = vld [vmem:[#allocation8 + $0x398] sm:$0xff]
        %v1541 = vld [vmem:[#allocation8 + $0x3a0] sm:$0xff]
        %v1542 = vld [vmem:[#allocation8 + $0x3a8] sm:$0xff]
        %v1543 = vld [vmem:[#allocation8 + $0x3b0] sm:$0xff]
        %v1544 = vld [vmem:[#allocation8 + $0x3b8] sm:$0xff]
        %v1545 = vld [vmem:[#allocation8 + $0x3c0] sm:$0xff]
        %v1546 = vld [vmem:[#allocation8 + $0x3c8] sm:$0xff]
        %v1547 = vld [vmem:[#allocation8 + $0x3d0] sm:$0xff]
        %v1548 = vld [vmem:[#allocation8 + $0x3d8] sm:$0xff]
        %v1549 = vld [vmem:[#allocation8 + $0x3e0] sm:$0xff]
        %v1550 = vld [vmem:[#allocation8 + $0x3e8] sm:$0xff]
        %v1551 = vld [vmem:[#allocation8 + $0x3f0] sm:$0xff]
        %v1552 = vld [vmem:[#allocation8 + $0x3f8] sm:$0xff]
        %v1553 = vld [vmem:[#allocation8 + $0x400] sm:$0xff]
        %v1554 = vld [vmem:[#allocation8 + $0x408] sm:$0xff]
        %v1555 = vld [vmem:[#allocation8 + $0x410] sm:$0xff]
        %v1556 = vld [vmem:[#allocation8 + $0x418] sm:$0xff]
        %v1557 = vld [vmem:[#allocation8 + $0x420] sm:$0xff]
        %v1558 = vld [vmem:[#allocation8 + $0x428] sm:$0xff]
        %v1559 = vld [vmem:[#allocation8 + $0x430] sm:$0xff]
        %v1560 = vld [vmem:[#allocation8 + $0x438] sm:$0xff]
        %v1561 = vld [vmem:[#allocation8 + $0x440] sm:$0xff]
        %v1562 = vld [vmem:[#allocation8 + $0x448] sm:$0xff]
        %v1563 = vld [vmem:[#allocation8 + $0x450] sm:$0xff]
        %v1564 = vld [vmem:[#allocation8 + $0x458] sm:$0xff]
        %v1565 = vld [vmem:[#allocation8 + $0x460] sm:$0xff]
        %v1566 = vld [vmem:[#allocation8 + $0x468] sm:$0xff]
        %v1567 = vld [vmem:[#allocation8 + $0x470] sm:$0xff]
        %v1568 = vld [vmem:[#allocation8 + $0x478] sm:$0xff]
        %v1569 = vld [vmem:[#allocation8 + $0x480] sm:$0xff]
        %v1570 = vld [vmem:[#allocation8 + $0x488] sm:$0xff]
        %v1571 = vld [vmem:[#allocation8 + $0x490] sm:$0xff]
        %v1572 = vld [vmem:[#allocation8 + $0x498] sm:$0xff]
        %v1573 = vld [vmem:[#allocation8 + $0x4a0] sm:$0xff]
        %v1574 = vld [vmem:[#allocation8 + $0x4a8] sm:$0xff]
        %v1575 = vld [vmem:[#allocation8 + $0x4b0] sm:$0xff]
        %v1576 = vld [vmem:[#allocation8 + $0x4b8] sm:$0xff]
        %v1577 = vld [vmem:[#allocation8 + $0x4c0] sm:$0xff]
        %v1578 = vld [vmem:[#allocation8 + $0x4c8] sm:$0xff]
        %v1579 = vld [vmem:[#allocation8 + $0x4d0] sm:$0xff]
        %v1580 = vld [vmem:[#allocation8 + $0x4d8] sm:$0xff]
        %v1581 = vld [vmem:[#allocation8 + $0x4e0] sm:$0xff]
        %v1582 = vld [vmem:[#allocation8 + $0x4e8] sm:$0xff]
        %v1583 = vld [vmem:[#allocation8 + $0x4f0] sm:$0xff]
        %v1584 = vld [vmem:[#allocation8 + $0x4f8] sm:$0xff]
        %v1585 = vld [vmem:[#allocation8 + $0x500] sm:$0xff]
        %v1586 = vld [vmem:[#allocation8 + $0x508] sm:$0xff]
        %v1587 = vld [vmem:[#allocation8 + $0x510] sm:$0xff]
        %v1588 = vld [vmem:[#allocation8 + $0x518] sm:$0xff]
        %v1589 = vld [vmem:[#allocation8 + $0x520] sm:$0xff]
        %v1590 = vld [vmem:[#allocation8 + $0x528] sm:$0xff]
        %v1591 = vld [vmem:[#allocation8 + $0x530] sm:$0xff]
        %v1592 = vld [vmem:[#allocation8 + $0x538] sm:$0xff]
        %v1593 = vld [vmem:[#allocation8 + $0x540] sm:$0xff]
        %v1594 = vld [vmem:[#allocation8 + $0x548] sm:$0xff]
        %v1595 = vld [vmem:[#allocation8 + $0x550] sm:$0xff]
        %v1596 = vld [vmem:[#allocation8 + $0x558] sm:$0xff]
        %v1597 = vld [vmem:[#allocation8 + $0x560] sm:$0xff]
        %v1598 = vld [vmem:[#allocation8 + $0x568] sm:$0xff]
        %v1599 = vld [vmem:[#allocation8 + $0x570] sm:$0xff]
        %v1600 = vld [vmem:[#allocation8 + $0x578] sm:$0xff]
        %v1601 = vld [vmem:[#allocation8 + $0x580] sm:$0xff]
        %v1602 = vld [vmem:[#allocation8 + $0x588] sm:$0xff]
        %v1603 = vld [vmem:[#allocation8 + $0x590] sm:$0xff]
        %v1604 = vld [vmem:[#allocation8 + $0x598] sm:$0xff]
        %v1605 = vld [vmem:[#allocation8 + $0x5a0] sm:$0xff]
        %v1606 = vld [vmem:[#allocation8 + $0x5a8] sm:$0xff]
        %v1607 = vld [vmem:[#allocation8 + $0x5b0] sm:$0xff]
        %v1608 = vld [vmem:[#allocation8 + $0x5b8] sm:$0xff]
        %v1609 = vld [vmem:[#allocation8 + $0x5c0] sm:$0xff]
        %v1610 = vld [vmem:[#allocation8 + $0x5c8] sm:$0xff]
        %v1611 = vld [vmem:[#allocation8 + $0x5d0] sm:$0xff]
        %v1612 = vld [vmem:[#allocation8 + $0x5d8] sm:$0xff]
        %v1613 = vld [vmem:[#allocation8 + $0x5e0] sm:$0xff]
        %v1614 = vld [vmem:[#allocation8 + $0x5e8] sm:$0xff]
        %v1615 = vld [vmem:[#allocation8 + $0x5f0] sm:$0xff]
        %v1616 = vld [vmem:[#allocation8 + $0x5f8] sm:$0xff]
        %v1617 = vld [vmem:[#allocation8 + $0x600] sm:$0xff]
        %v1618 = vld [vmem:[#allocation8 + $0x608] sm:$0xff]
        %v1619 = vld [vmem:[#allocation8 + $0x610] sm:$0xff]
        %v1620 = vld [vmem:[#allocation8 + $0x618] sm:$0xff]
        %v1621 = vld [vmem:[#allocation8 + $0x620] sm:$0xff]
        %v1622 = vld [vmem:[#allocation8 + $0x628] sm:$0xff]
        %v1623 = vld [vmem:[#allocation8 + $0x630] sm:$0xff]
        %v1624 = vld [vmem:[#allocation8 + $0x638] sm:$0xff]
        %v1625 = vld [vmem:[#allocation8 + $0x640] sm:$0xff]
        %v1626 = vld [vmem:[#allocation8 + $0x648] sm:$0xff]
        %v1627 = vld [vmem:[#allocation8 + $0x650] sm:$0xff]
        %v1628 = vld [vmem:[#allocation8 + $0x658] sm:$0xff]
        %v1629 = vld [vmem:[#allocation8 + $0x660] sm:$0xff]
        %v1630 = vld [vmem:[#allocation8 + $0x668] sm:$0xff]
        %v1631 = vld [vmem:[#allocation8 + $0x670] sm:$0xff]
        %v1632 = vld [vmem:[#allocation8 + $0x678] sm:$0xff]
        %v1633 = vld [vmem:[#allocation8 + $0x680] sm:$0xff]
        %v1634 = vld [vmem:[#allocation8 + $0x688] sm:$0xff]
        %v1635 = vld [vmem:[#allocation8 + $0x690] sm:$0xff]
        %v1636 = vld [vmem:[#allocation8 + $0x698] sm:$0xff]
        %v1637 = vld [vmem:[#allocation8 + $0x6a0] sm:$0xff]
        %v1638 = vld [vmem:[#allocation8 + $0x6a8] sm:$0xff]
        %v1639 = vld [vmem:[#allocation8 + $0x6b0] sm:$0xff]
        %v1640 = vld [vmem:[#allocation8 + $0x6b8] sm:$0xff]
        %v1641 = vld [vmem:[#allocation8 + $0x6c0] sm:$0xff]
        %v1642 = vld [vmem:[#allocation8 + $0x6c8] sm:$0xff]
        %v1643 = vld [vmem:[#allocation8 + $0x6d0] sm:$0xff]
        %v1644 = vld [vmem:[#allocation8 + $0x6d8] sm:$0xff]
        %v1645 = vld [vmem:[#allocation8 + $0x6e0] sm:$0xff]
        %v1646 = vld [vmem:[#allocation8 + $0x6e8] sm:$0xff]
        %v1647 = vld [vmem:[#allocation8 + $0x6f0] sm:$0xff]
        %v1648 = vld [vmem:[#allocation8 + $0x6f8] sm:$0xff]
        %v1649 = vld [vmem:[#allocation8 + $0x700] sm:$0xff]
        %v1650 = vld [vmem:[#allocation8 + $0x708] sm:$0xff]
        %v1651 = vld [vmem:[#allocation8 + $0x710] sm:$0xff]
        %v1652 = vld [vmem:[#allocation8 + $0x718] sm:$0xff]
        %v1653 = vld [vmem:[#allocation8 + $0x720] sm:$0xff]
        %v1654 = vld [vmem:[#allocation8 + $0x728] sm:$0xff]
        %v1655 = vld [vmem:[#allocation8 + $0x730] sm:$0xff]
        %v1656 = vld [vmem:[#allocation8 + $0x738] sm:$0xff]
        %v1657 = vld [vmem:[#allocation8 + $0x740] sm:$0xff]
        %v1658 = vld [vmem:[#allocation8 + $0x748] sm:$0xff]
        %v1659 = vld [vmem:[#allocation8 + $0x750] sm:$0xff]
        %v1660 = vld [vmem:[#allocation8 + $0x758] sm:$0xff]
        %v1661 = vld [vmem:[#allocation8 + $0x760] sm:$0xff]
        %v1662 = vld [vmem:[#allocation8 + $0x768] sm:$0xff]
        %v1663 = vld [vmem:[#allocation8 + $0x770] sm:$0xff]
        %v1664 = vld [vmem:[#allocation8 + $0x778] sm:$0xff]
        %v1665 = vld [vmem:[#allocation8 + $0x780] sm:$0xff]
        %v1666 = vld [vmem:[#allocation8 + $0x788] sm:$0xff]
        %v1667 = vld [vmem:[#allocation8 + $0x790] sm:$0xff]
        %v1668 = vld [vmem:[#allocation8 + $0x798] sm:$0xff]
        %v1669 = vld [vmem:[#allocation8 + $0x7a0] sm:$0xff]
        %v1670 = vld [vmem:[#allocation8 + $0x7a8] sm:$0xff]
        %v1671 = vld [vmem:[#allocation8 + $0x7b0] sm:$0xff]
        %v1672 = vld [vmem:[#allocation8 + $0x7b8] sm:$0xff]
        %v1673 = vld [vmem:[#allocation8 + $0x7c0] sm:$0xff]
        %v1674 = vld [vmem:[#allocation8 + $0x7c8] sm:$0xff]
        %v1675 = vld [vmem:[#allocation8 + $0x7d0] sm:$0xff]
        %v1676 = vld [vmem:[#allocation8 + $0x7d8] sm:$0xff]
        %v1677 = vld [vmem:[#allocation8 + $0x7e0] sm:$0xff]
        %v1678 = vld [vmem:[#allocation8 + $0x7e8] sm:$0xff]
        %v1679 = vld [vmem:[#allocation8 + $0x7f0] sm:$0xff]
        %v1680 = vld [vmem:[#allocation8 + $0x7f8] sm:$0xff]
        %v1681 = vld [vmem:[#allocation8 + $0x800] sm:$0xff]
        %v1682 = vld [vmem:[#allocation8 + $0x808] sm:$0xff]
        %v1683 = vld [vmem:[#allocation8 + $0x810] sm:$0xff]
        %v1684 = vld [vmem:[#allocation8 + $0x818] sm:$0xff]
        %v1685 = vld [vmem:[#allocation8 + $0x820] sm:$0xff]
        %v1686 = vld [vmem:[#allocation8 + $0x828] sm:$0xff]
        %v1687 = vld [vmem:[#allocation8 + $0x830] sm:$0xff]
        %v1688 = vld [vmem:[#allocation8 + $0x838] sm:$0xff]
        %v1689 = vld [vmem:[#allocation8 + $0x840] sm:$0xff]
        %v1690 = vld [vmem:[#allocation8 + $0x848] sm:$0xff]
        %v1691 = vld [vmem:[#allocation8 + $0x850] sm:$0xff]
        %v1692 = vld [vmem:[#allocation8 + $0x858] sm:$0xff]
        %v1693 = vld [vmem:[#allocation8 + $0x860] sm:$0xff]
        %v1694 = vld [vmem:[#allocation8 + $0x868] sm:$0xff]
        %v1695 = vld [vmem:[#allocation8 + $0x870] sm:$0xff]
        %v1696 = vld [vmem:[#allocation8 + $0x878] sm:$0xff]
        %v1697 = vld [vmem:[#allocation8 + $0x880] sm:$0xff]
        %v1698 = vld [vmem:[#allocation8 + $0x888] sm:$0xff]
        %v1699 = vld [vmem:[#allocation8 + $0x890] sm:$0xff]
        %v1700 = vld [vmem:[#allocation8 + $0x898] sm:$0xff]
        %v1701 = vld [vmem:[#allocation8 + $0x8a0] sm:$0xff]
        %v1702 = vld [vmem:[#allocation8 + $0x8a8] sm:$0xff]
        %v1703 = vld [vmem:[#allocation8 + $0x8b0] sm:$0xff]
        %v1704 = vld [vmem:[#allocation8 + $0x8b8] sm:$0xff]
        %v1705 = vld [vmem:[#allocation8 + $0x8c0] sm:$0xff]
        %v1706 = vld [vmem:[#allocation8 + $0x8c8] sm:$0xff]
        %v1707 = vld [vmem:[#allocation8 + $0x8d0] sm:$0xff]
        %v1708 = vld [vmem:[#allocation8 + $0x8d8] sm:$0xff]
        %v1709 = vld [vmem:[#allocation8 + $0x8e0] sm:$0xff]
        %v1710 = vld [vmem:[#allocation8 + $0x8e8] sm:$0xff]
        %v1711 = vld [vmem:[#allocation8 + $0x8f0] sm:$0xff]
        %v1712 = vld [vmem:[#allocation8 + $0x8f8] sm:$0xff]
        %v1713 = vld [vmem:[#allocation8 + $0x900] sm:$0xff]
        %v1714 = vld [vmem:[#allocation8 + $0x908] sm:$0xff]
        %v1715 = vld [vmem:[#allocation8 + $0x910] sm:$0xff]
        %v1716 = vld [vmem:[#allocation8 + $0x918] sm:$0xff]
        %v1717 = vld [vmem:[#allocation8 + $0x920] sm:$0xff]
        %v1718 = vld [vmem:[#allocation8 + $0x928] sm:$0xff]
        %v1719 = vld [vmem:[#allocation8 + $0x930] sm:$0xff]
        %v1720 = vld [vmem:[#allocation8 + $0x938] sm:$0xff]
        %v1721 = vld [vmem:[#allocation8 + $0x940] sm:$0xff]
        %v1722 = vld [vmem:[#allocation8 + $0x948] sm:$0xff]
        %v1723 = vld [vmem:[#allocation8 + $0x950] sm:$0xff]
        %v1724 = vld [vmem:[#allocation8 + $0x958] sm:$0xff]
        %v1725 = vld [vmem:[#allocation8 + $0x960] sm:$0xff]
        %v1726 = vld [vmem:[#allocation8 + $0x968] sm:$0xff]
        %v1727 = vld [vmem:[#allocation8 + $0x970] sm:$0xff]
        %v1728 = vld [vmem:[#allocation8 + $0x978] sm:$0xff]
        %v1729 = vld [vmem:[#allocation8 + $0x980] sm:$0xff]
        %v1730 = vld [vmem:[#allocation8 + $0x988] sm:$0xff]
        %v1731 = vld [vmem:[#allocation8 + $0x990] sm:$0xff]
        %v1732 = vld [vmem:[#allocation8 + $0x998] sm:$0xff]
        %v1733 = vld [vmem:[#allocation8 + $0x9a0] sm:$0xff]
        %v1734 = vld [vmem:[#allocation8 + $0x9a8] sm:$0xff]
        %v1735 = vld [vmem:[#allocation8 + $0x9b0] sm:$0xff]
        %v1736 = vld [vmem:[#allocation8 + $0x9b8] sm:$0xff]
        %v1737 = vld [vmem:[#allocation8 + $0x9c0] sm:$0xff]
        %v1738 = vld [vmem:[#allocation8 + $0x9c8] sm:$0xff]
        %v1739 = vld [vmem:[#allocation8 + $0x9d0] sm:$0xff]
        %v1740 = vld [vmem:[#allocation8 + $0x9d8] sm:$0xff]
        %v1741 = vld [vmem:[#allocation8 + $0x9e0] sm:$0xff]
        %v1742 = vld [vmem:[#allocation8 + $0x9e8] sm:$0xff]
        %v1743 = vld [vmem:[#allocation8 + $0x9f0] sm:$0xff]
        %v1744 = vld [vmem:[#allocation8 + $0x9f8] sm:$0xff]
        %v1745 = vld [vmem:[#allocation8 + $0xa00] sm:$0xff]
        %v1746 = vld [vmem:[#allocation8 + $0xa08] sm:$0xff]
        %v1747 = vld [vmem:[#allocation8 + $0xa10] sm:$0xff]
        %v1748 = vld [vmem:[#allocation8 + $0xa18] sm:$0xff]
        %v1749 = vld [vmem:[#allocation8 + $0xa20] sm:$0xff]
        %v1750 = vld [vmem:[#allocation8 + $0xa28] sm:$0xff]
        %v1751 = vld [vmem:[#allocation8 + $0xa30] sm:$0xff]
        %v1752 = vld [vmem:[#allocation8 + $0xa38] sm:$0xff]
        %v1753 = vld [vmem:[#allocation8 + $0xa40] sm:$0xff]
        %v1754 = vld [vmem:[#allocation8 + $0xa48] sm:$0xff]
        %v1755 = vld [vmem:[#allocation8 + $0xa50] sm:$0xff]
        %v1756 = vld [vmem:[#allocation8 + $0xa58] sm:$0xff]
        %v1757 = vld [vmem:[#allocation8 + $0xa60] sm:$0xff]
        %v1758 = vld [vmem:[#allocation8 + $0xa68] sm:$0xff]
        %v1759 = vld [vmem:[#allocation8 + $0xa70] sm:$0xff]
        %v1760 = vld [vmem:[#allocation8 + $0xa78] sm:$0xff]
        %v1761 = vld [vmem:[#allocation8 + $0xa80] sm:$0xff]
        %v1762 = vld [vmem:[#allocation8 + $0xa88] sm:$0xff]
        %v1763 = vld [vmem:[#allocation8 + $0xa90] sm:$0xff]
        %v1764 = vld [vmem:[#allocation8 + $0xa98] sm:$0xff]
        %v1765 = vld [vmem:[#allocation8 + $0xaa0] sm:$0xff]
        %v1766 = vld [vmem:[#allocation8 + $0xaa8] sm:$0xff]
        %v1767 = vld [vmem:[#allocation8 + $0xab0] sm:$0xff]
        %v1768 = vld [vmem:[#allocation8 + $0xab8] sm:$0xff]
        %v1769 = vld [vmem:[#allocation8 + $0xac0] sm:$0xff]
        %v1770 = vld [vmem:[#allocation8 + $0xac8] sm:$0xff]
        %v1771 = vld [vmem:[#allocation8 + $0xad0] sm:$0xff]
        %v1772 = vld [vmem:[#allocation8 + $0xad8] sm:$0xff]
        %v1773 = vld [vmem:[#allocation8 + $0xae0] sm:$0xff]
        %v1774 = vld [vmem:[#allocation8 + $0xae8] sm:$0xff]
        %v1775 = vld [vmem:[#allocation8 + $0xaf0] sm:$0xff]
        %v1776 = vld [vmem:[#allocation8 + $0xaf8] sm:$0xff]
        %v1777 = vld [vmem:[#allocation8 + $0xb00] sm:$0xff]
        %v1778 = vld [vmem:[#allocation8 + $0xb08] sm:$0xff]
        %v1779 = vld [vmem:[#allocation8 + $0xb10] sm:$0xff]
        %v1780 = vld [vmem:[#allocation8 + $0xb18] sm:$0xff]
        %v1781 = vld [vmem:[#allocation8 + $0xb20] sm:$0xff]
        %v1782 = vld [vmem:[#allocation8 + $0xb28] sm:$0xff]
        %v1783 = vld [vmem:[#allocation8 + $0xb30] sm:$0xff]
        %v1784 = vld [vmem:[#allocation8 + $0xb38] sm:$0xff]
        %v1785 = vld [vmem:[#allocation8 + $0xb40] sm:$0xff]
        %v1786 = vld [vmem:[#allocation8 + $0xb48] sm:$0xff]
        %v1787 = vld [vmem:[#allocation8 + $0xb50] sm:$0xff]
        %v1788 = vld [vmem:[#allocation8 + $0xb58] sm:$0xff]
        %v1789 = vld [vmem:[#allocation8 + $0xb60] sm:$0xff]
        %v1790 = vld [vmem:[#allocation8 + $0xb68] sm:$0xff]
        %v1791 = vld [vmem:[#allocation8 + $0xb70] sm:$0xff]
        %v1792 = vld [vmem:[#allocation8 + $0xb78] sm:$0xff]
        %v1793 = vld [vmem:[#allocation8 + $0xb80] sm:$0xff]
        %v1794 = vld [vmem:[#allocation8 + $0xb88] sm:$0xff]
        %v1795 = vld [vmem:[#allocation8 + $0xb90] sm:$0xff]
        %v1796 = vld [vmem:[#allocation8 + $0xb98] sm:$0xff]
        %v1797 = vld [vmem:[#allocation8 + $0xba0] sm:$0xff]
        %v1798 = vld [vmem:[#allocation8 + $0xba8] sm:$0xff]
        %v1799 = vld [vmem:[#allocation8 + $0xbb0] sm:$0xff]
        %v1800 = vld [vmem:[#allocation8 + $0xbb8] sm:$0xff]
        %v1801 = vld [vmem:[#allocation8 + $0xbc0] sm:$0xff]
        %v1802 = vld [vmem:[#allocation8 + $0xbc8] sm:$0xff]
        %v1803 = vld [vmem:[#allocation8 + $0xbd0] sm:$0xff]
        %v1804 = vld [vmem:[#allocation8 + $0xbd8] sm:$0xff]
        %v1805 = vld [vmem:[#allocation8 + $0xbe0] sm:$0xff]
        %v1806 = vld [vmem:[#allocation8 + $0xbe8] sm:$0xff]
        %v1807 = vld [vmem:[#allocation8 + $0xbf0] sm:$0xff]
        %v1808 = vld [vmem:[#allocation8 + $0xbf8] sm:$0xff]
        %v1809 = vld [vmem:[#allocation8 + $0xc00] sm:$0xff]
        %v1810 = vld [vmem:[#allocation8 + $0xc08] sm:$0xff]
        %v1811 = vld [vmem:[#allocation8 + $0xc10] sm:$0xff]
        %v1812 = vld [vmem:[#allocation8 + $0xc18] sm:$0xff]
        %v1813 = vld [vmem:[#allocation8 + $0xc20] sm:$0xff]
        %v1814 = vld [vmem:[#allocation8 + $0xc28] sm:$0xff]
        %v1815 = vld [vmem:[#allocation8 + $0xc30] sm:$0xff]
        %v1816 = vld [vmem:[#allocation8 + $0xc38] sm:$0xff]
        %v1817 = vld [vmem:[#allocation8 + $0xc40] sm:$0xff]
        %v1818 = vld [vmem:[#allocation8 + $0xc48] sm:$0xff]
        %v1819 = vld [vmem:[#allocation8 + $0xc50] sm:$0xff]
        %v1820 = vld [vmem:[#allocation8 + $0xc58] sm:$0xff]
        %v1821 = vld [vmem:[#allocation8 + $0xc60] sm:$0xff]
        %v1822 = vld [vmem:[#allocation8 + $0xc68] sm:$0xff]
        %v1823 = vld [vmem:[#allocation8 + $0xc70] sm:$0xff]
        %v1824 = vld [vmem:[#allocation8 + $0xc78] sm:$0xff]
        %v1825 = vld [vmem:[#allocation8 + $0xc80] sm:$0xff]
        %v1826 = vld [vmem:[#allocation8 + $0xc88] sm:$0xff]
        %v1827 = vld [vmem:[#allocation8 + $0xc90] sm:$0xff]
        %v1828 = vld [vmem:[#allocation8 + $0xc98] sm:$0xff]
        %v1829 = vld [vmem:[#allocation8 + $0xca0] sm:$0xff]
        %v1830 = vld [vmem:[#allocation8 + $0xca8] sm:$0xff]
        %v1831 = vld [vmem:[#allocation8 + $0xcb0] sm:$0xff]
        %v1832 = vld [vmem:[#allocation8 + $0xcb8] sm:$0xff]
        %v1833 = vld [vmem:[#allocation8 + $0xcc0] sm:$0xff]
        %v1834 = vld [vmem:[#allocation8 + $0xcc8] sm:$0xff]
        %v1835 = vld [vmem:[#allocation8 + $0xcd0] sm:$0xff]
        %v1836 = vld [vmem:[#allocation8 + $0xcd8] sm:$0xff]
        %v1837 = vld [vmem:[#allocation8 + $0xce0] sm:$0xff]
        %v1838 = vld [vmem:[#allocation8 + $0xce8] sm:$0xff]
        %v1839 = vld [vmem:[#allocation8 + $0xcf0] sm:$0xff]
        %v1840 = vld [vmem:[#allocation8 + $0xcf8] sm:$0xff]
        %v1841 = vld [vmem:[#allocation8 + $0xd00] sm:$0xff]
        %v1842 = vld [vmem:[#allocation8 + $0xd08] sm:$0xff]
        %v1843 = vld [vmem:[#allocation8 + $0xd10] sm:$0xff]
        %v1844 = vld [vmem:[#allocation8 + $0xd18] sm:$0xff]
        %v1845 = vld [vmem:[#allocation8 + $0xd20] sm:$0xff]
        %v1846 = vld [vmem:[#allocation8 + $0xd28] sm:$0xff]
        %v1847 = vld [vmem:[#allocation8 + $0xd30] sm:$0xff]
        %v1848 = vld [vmem:[#allocation8 + $0xd38] sm:$0xff]
        %v1849 = vld [vmem:[#allocation8 + $0xd40] sm:$0xff]
        %v1850 = vld [vmem:[#allocation8 + $0xd48] sm:$0xff]
        %v1851 = vld [vmem:[#allocation8 + $0xd50] sm:$0xff]
        %v1852 = vld [vmem:[#allocation8 + $0xd58] sm:$0xff]
        %v1853 = vld [vmem:[#allocation8 + $0xd60] sm:$0xff]
        %v1854 = vld [vmem:[#allocation8 + $0xd68] sm:$0xff]
        %v1855 = vld [vmem:[#allocation8 + $0xd70] sm:$0xff]
        %v1856 = vld [vmem:[#allocation8 + $0xd78] sm:$0xff]
        %v1857 = vld [vmem:[#allocation8 + $0xd80] sm:$0xff]
        %v1858 = vld [vmem:[#allocation8 + $0xd88] sm:$0xff]
        %v1859 = vld [vmem:[#allocation8 + $0xd90] sm:$0xff]
        %v1860 = vld [vmem:[#allocation8 + $0xd98] sm:$0xff]
        %v1861 = vld [vmem:[#allocation8 + $0xda0] sm:$0xff]
        %v1862 = vld [vmem:[#allocation8 + $0xda8] sm:$0xff]
        %v1863 = vld [vmem:[#allocation8 + $0xdb0] sm:$0xff]
        %v1864 = vld [vmem:[#allocation8 + $0xdb8] sm:$0xff]
        %v1865 = vld [vmem:[#allocation8 + $0xdc0] sm:$0xff]
        %v1866 = vld [vmem:[#allocation8 + $0xdc8] sm:$0xff]
        %v1867 = vld [vmem:[#allocation8 + $0xdd0] sm:$0xff]
        %v1868 = vld [vmem:[#allocation8 + $0xdd8] sm:$0xff]
        %v1869 = vld [vmem:[#allocation8 + $0xde0] sm:$0xff]
        %v1870 = vld [vmem:[#allocation8 + $0xde8] sm:$0xff]
        %v1871 = vld [vmem:[#allocation8 + $0xdf0] sm:$0xff]
        %v1872 = vld [vmem:[#allocation8 + $0xdf8] sm:$0xff]
        %v1873 = vld [vmem:[#allocation8 + $0xe00] sm:$0xff]
        %v1874 = vld [vmem:[#allocation8 + $0xe08] sm:$0xff]
        %v1875 = vld [vmem:[#allocation8 + $0xe10] sm:$0xff]
        %v1876 = vld [vmem:[#allocation8 + $0xe18] sm:$0xff]
        %v1877 = vld [vmem:[#allocation8 + $0xe20] sm:$0xff]
        %v1878 = vld [vmem:[#allocation8 + $0xe28] sm:$0xff]
        %v1879 = vld [vmem:[#allocation8 + $0xe30] sm:$0xff]
        %v1880 = vld [vmem:[#allocation8 + $0xe38] sm:$0xff]
        %v1881 = vld [vmem:[#allocation8 + $0xe40] sm:$0xff]
        %v1882 = vld [vmem:[#allocation8 + $0xe48] sm:$0xff]
        %v1883 = vld [vmem:[#allocation8 + $0xe50] sm:$0xff]
        %v1884 = vld [vmem:[#allocation8 + $0xe58] sm:$0xff]
        %v1885 = vld [vmem:[#allocation8 + $0xe60] sm:$0xff]
        %v1886 = vld [vmem:[#allocation8 + $0xe68] sm:$0xff]
        %v1887 = vld [vmem:[#allocation8 + $0xe70] sm:$0xff]
        %v1888 = vld [vmem:[#allocation8 + $0xe78] sm:$0xff]
        %v1889 = vld [vmem:[#allocation8 + $0xe80] sm:$0xff]
        %v1890 = vld [vmem:[#allocation8 + $0xe88] sm:$0xff]
        %v1891 = vld [vmem:[#allocation8 + $0xe90] sm:$0xff]
        %v1892 = vld [vmem:[#allocation8 + $0xe98] sm:$0xff]
        %v1893 = vld [vmem:[#allocation8 + $0xea0] sm:$0xff]
        %v1894 = vld [vmem:[#allocation8 + $0xea8] sm:$0xff]
        %v1895 = vld [vmem:[#allocation8 + $0xeb0] sm:$0xff]
        %v1896 = vld [vmem:[#allocation8 + $0xeb8] sm:$0xff]
        %v1897 = vld [vmem:[#allocation8 + $0xec0] sm:$0xff]
        %v1898 = vld [vmem:[#allocation8 + $0xec8] sm:$0xff]
        %v1899 = vld [vmem:[#allocation8 + $0xed0] sm:$0xff]
        %v1900 = vld [vmem:[#allocation8 + $0xed8] sm:$0xff]
        %v1901 = vld [vmem:[#allocation8 + $0xee0] sm:$0xff]
        %v1902 = vld [vmem:[#allocation8 + $0xee8] sm:$0xff]
        %v1903 = vld [vmem:[#allocation8 + $0xef0] sm:$0xff]
        %v1904 = vld [vmem:[#allocation8 + $0xef8] sm:$0xff]
        %v1905 = vld [vmem:[#allocation8 + $0xf00] sm:$0xff]
        %v1906 = vld [vmem:[#allocation8 + $0xf08] sm:$0xff]
        %v1907 = vld [vmem:[#allocation8 + $0xf10] sm:$0xff]
        %v1908 = vld [vmem:[#allocation8 + $0xf18] sm:$0xff]
        %v1909 = vld [vmem:[#allocation8 + $0xf20] sm:$0xff]
        %v1910 = vld [vmem:[#allocation8 + $0xf28] sm:$0xff]
        %v1911 = vld [vmem:[#allocation8 + $0xf30] sm:$0xff]
        %v1912 = vld [vmem:[#allocation8 + $0xf38] sm:$0xff]
        %v1913 = vld [vmem:[#allocation8 + $0xf40] sm:$0xff]
        %v1914 = vld [vmem:[#allocation8 + $0xf48] sm:$0xff]
        %v1915 = vld [vmem:[#allocation8 + $0xf50] sm:$0xff]
        %v1916 = vld [vmem:[#allocation8 + $0xf58] sm:$0xff]
        %v1917 = vld [vmem:[#allocation8 + $0xf60] sm:$0xff]
        %v1918 = vld [vmem:[#allocation8 + $0xf68] sm:$0xff]
        %v1919 = vld [vmem:[#allocation8 + $0xf70] sm:$0xff]
        %v1920 = vld [vmem:[#allocation8 + $0xf78] sm:$0xff]
        %v1921 = vld [vmem:[#allocation8 + $0xf80] sm:$0xff]
        %v1922 = vld [vmem:[#allocation8 + $0xf88] sm:$0xff]
        %v1923 = vld [vmem:[#allocation8 + $0xf90] sm:$0xff]
        %v1924 = vld [vmem:[#allocation8 + $0xf98] sm:$0xff]
        %v1925 = vld [vmem:[#allocation8 + $0xfa0] sm:$0xff]
        %v1926 = vld [vmem:[#allocation8 + $0xfa8] sm:$0xff]
        %v1927 = vld [vmem:[#allocation8 + $0xfb0] sm:$0xff]
        %v1928 = vld [vmem:[#allocation8 + $0xfb8] sm:$0xff]
        %v1929 = vld [vmem:[#allocation8 + $0xfc0] sm:$0xff]
        %v1930 = vld [vmem:[#allocation8 + $0xfc8] sm:$0xff]
        %v1931 = vld [vmem:[#allocation8 + $0xfd0] sm:$0xff]
        %v1932 = vld [vmem:[#allocation8 + $0xfd8] sm:$0xff]
        %v1933 = vld [vmem:[#allocation8 + $0xfe0] sm:$0xff]
        %v1934 = vld [vmem:[#allocation8 + $0xfe8] sm:$0xff]
        %v1935 = vld [vmem:[#allocation8 + $0xff0] sm:$0xff]
        %v1936 = vld [vmem:[#allocation8 + $0xff8] sm:$0xff]
        %v1937 = vld [vmem:[#allocation10] sm:$0xff]
        %v1939 = vlaneseq
        %v1940 = vshrl.u32 %v1939, 7
        %v1941 = vsub.s32 0, %v1940
        %v1942 = vrot.slane %v1937, %v1941
        %v1943 = vlaneseq
        %v1944 = vshrl.u32 %v1943, 7
        %v1945 = vsub.s32 1, %v1944
        %v1946 = vrot.slane %v1937, %v1945
        %v1947 = vlaneseq
        %v1948 = vshrl.u32 %v1947, 7
        %v1949 = vsub.s32 2, %v1948
        %v1950 = vrot.slane %v1937, %v1949
        %v1951 = vlaneseq
        %v1952 = vshrl.u32 %v1951, 7
        %v1953 = vsub.s32 3, %v1952
        %v1954 = vrot.slane %v1937, %v1953
        %v1955 = vlaneseq
        %v1956 = vshrl.u32 %v1955, 7
        %v1957 = vsub.s32 4, %v1956
        %v1958 = vrot.slane %v1937, %v1957
        %v1959 = vlaneseq
        %v1960 = vshrl.u32 %v1959, 7
        %v1961 = vsub.s32 5, %v1960
        %v1962 = vrot.slane %v1937, %v1961
        %v1963 = vlaneseq
        %v1964 = vshrl.u32 %v1963, 7
        %v1965 = vsub.s32 6, %v1964
        %v1966 = vrot.slane %v1937, %v1965
        %v1967 = vlaneseq
        %v1968 = vshrl.u32 %v1967, 7
        %v1969 = vsub.s32 7, %v1968
        %v1970 = vrot.slane %v1937, %v1969
        %1979 = vmatprep.subr.mxu0 %v1546
        %1980 = vmatpush1.msra.mxu0 %v1545
        %1981 = vmatprep.subr.mxu0 %v1538
        %1982 = vmatpush1.msra.mxu0 %v1537
        %1983 = vmatprep.subr.mxu0 %v1530
        %1984 = vmatpush1.msra.mxu0 %v1529
        %1985 = vmatprep.subr.mxu0 %v1522
        %1986 = vmatpush1.msra.mxu0 %v1521
        %1987 = vmatprep.subr.mxu0 %v1514
        %1988 = vmatpush1.msra.mxu0 %v1513
        %1989 = vmatprep.subr.mxu0 %v1506
        %1990 = vmatpush1.msra.mxu0 %v1505
        %1991 = vmatprep.subr.mxu0 %v1498
        %1992 = vmatpush1.msra.mxu0 %v1497
        %1993 = vmatprep.subr.mxu0 %v1490
        %1994 = vmatpush1.msra.mxu0 %v1489
        %1995 = vmatprep.subr.mxu0 %v1482
        %1996 = vmatpush1.msra.mxu0 %v1481
        %1997 = vmatprep.subr.mxu0 %v1474
        %1998 = vmatpush1.msra.mxu0 %v1473
        %1999 = vmatprep.subr.mxu0 %v1466
        %2000 = vmatpush1.msra.mxu0 %v1465
        %2001 = vmatprep.subr.mxu0 %v1458
        %2002 = vmatpush1.msra.mxu0 %v1457
        %2003 = vmatprep.subr.mxu0 %v1450
        %2004 = vmatpush1.msra.mxu0 %v1449
        %2005 = vmatprep.subr.mxu0 %v1442
        %2006 = vmatpush1.msra.mxu0 %v1441
        %2007 = vmatprep.subr.mxu0 %v1434
        %2008 = vmatpush1.msra.mxu0 %v1433
        %2009 = vmatprep.subr.mxu0 %v1426
        %2010 = vmatpush1.msra.mxu0 %v1425
        %2011 = vmatprep.subr.mxu0 %v1674
        %2012 = vmatpush2.msra.mxu0 %v1673
        %2013 = vmatprep.subr.mxu0 %v1666
        %2014 = vmatpush2.msra.mxu0 %v1665
        %2015 = vmatprep.subr.mxu0 %v1658
        %2016 = vmatpush2.msra.mxu0 %v1657
        %2017 = vmatprep.subr.mxu0 %v1650
        %2018 = vmatpush2.msra.mxu0 %v1649
        %2019 = vmatprep.subr.mxu0 %v1642
        %2020 = vmatpush2.msra.mxu0 %v1641
        %2021 = vmatprep.subr.mxu0 %v1634
        %2022 = vmatpush2.msra.mxu0 %v1633
        %2023 = vmatprep.subr.mxu0 %v1626
        %2024 = vmatpush2.msra.mxu0 %v1625
        %2025 = vmatprep.subr.mxu0 %v1618
        %2026 = vmatpush2.msra.mxu0 %v1617
        %2027 = vmatprep.subr.mxu0 %v1610
        %2028 = vmatpush2.msra.mxu0 %v1609
        %2029 = vmatprep.subr.mxu0 %v1602
        %2030 = vmatpush2.msra.mxu0 %v1601
        %2031 = vmatprep.subr.mxu0 %v1594
        %2032 = vmatpush2.msra.mxu0 %v1593
        %2033 = vmatprep.subr.mxu0 %v1586
        %2034 = vmatpush2.msra.mxu0 %v1585
        %2035 = vmatprep.subr.mxu0 %v1578
        %2036 = vmatpush2.msra.mxu0 %v1577
        %2037 = vmatprep.subr.mxu0 %v1570
        %2038 = vmatpush2.msra.mxu0 %v1569
        %2039 = vmatprep.subr.mxu0 %v1562
        %2040 = vmatpush2.msra.mxu0 %v1561
        %2041 = vmatprep.subr.mxu0 %v1554
        %2042 = vmatpush2.msra.mxu0 %v1553
        %2043 = vmatprep.mubr.f32.mxu0 %v1422
        %2044 = vmatmul.mubr.f32.gmra.mxu0 %v1421
        %v2045 = vpop.f32.mrf.mxu0
        %v2046 = vadd.f32 %v1942, %v2045
        %v2047 = vpop.f32.mrf.mxu0
        %v2048 = vadd.f32 %v1946, %v2047
        %2049 = vdwg.mxu0
        %2050 = vmatprep.subr.mxu0 %v1802
        %2051 = vmatpush1.msra.mxu0 %v1801
        %2052 = vmatprep.subr.mxu0 %v1794
        %2053 = vmatpush1.msra.mxu0 %v1793
        %2054 = vmatprep.subr.mxu0 %v1786
        %2055 = vmatpush1.msra.mxu0 %v1785
        %2056 = vmatprep.subr.mxu0 %v1778
        %2057 = vmatpush1.msra.mxu0 %v1777
        %2058 = vmatprep.subr.mxu0 %v1770
        %2059 = vmatpush1.msra.mxu0 %v1769
        %2060 = vmatprep.subr.mxu0 %v1762
        %2061 = vmatpush1.msra.mxu0 %v1761
        %2062 = vmatprep.subr.mxu0 %v1754
        %2063 = vmatpush1.msra.mxu0 %v1753
        %2064 = vmatprep.subr.mxu0 %v1746
        %2065 = vmatpush1.msra.mxu0 %v1745
        %2066 = vmatprep.subr.mxu0 %v1738
        %2067 = vmatpush1.msra.mxu0 %v1737
        %2068 = vmatprep.subr.mxu0 %v1730
        %2069 = vmatpush1.msra.mxu0 %v1729
        %2070 = vmatprep.subr.mxu0 %v1722
        %2071 = vmatpush1.msra.mxu0 %v1721
        %2072 = vmatprep.subr.mxu0 %v1714
        %2073 = vmatpush1.msra.mxu0 %v1713
        %2074 = vmatprep.subr.mxu0 %v1706
        %2075 = vmatpush1.msra.mxu0 %v1705
        %2076 = vmatprep.subr.mxu0 %v1698
        %2077 = vmatpush1.msra.mxu0 %v1697
        %2078 = vmatprep.subr.mxu0 %v1690
        %2079 = vmatpush1.msra.mxu0 %v1689
        %2080 = vmatprep.subr.mxu0 %v1682
        %2081 = vmatpush1.msra.mxu0 %v1681
        %2082 = vmatprep.subr.mxu0 %v1930
        %2083 = vmatpush2.msra.mxu0 %v1929
        %2084 = vmatprep.subr.mxu0 %v1922
        %2085 = vmatpush2.msra.mxu0 %v1921
        %2086 = vmatprep.subr.mxu0 %v1914
        %2087 = vmatpush2.msra.mxu0 %v1913
        %2088 = vmatprep.subr.mxu0 %v1906
        %2089 = vmatpush2.msra.mxu0 %v1905
        %2090 = vmatprep.subr.mxu0 %v1898
        %2091 = vmatpush2.msra.mxu0 %v1897
        %2092 = vmatprep.subr.mxu0 %v1890
        %2093 = vmatpush2.msra.mxu0 %v1889
        %2094 = vmatprep.subr.mxu0 %v1882
        %2095 = vmatpush2.msra.mxu0 %v1881
        %2096 = vmatprep.subr.mxu0 %v1874
        %2097 = vmatpush2.msra.mxu0 %v1873
        %2098 = vmatprep.subr.mxu0 %v1866
        %2099 = vmatpush2.msra.mxu0 %v1865
        %2100 = vmatprep.subr.mxu0 %v1858
        %2101 = vmatpush2.msra.mxu0 %v1857
        %2102 = vmatprep.subr.mxu0 %v1850
        %2103 = vmatpush2.msra.mxu0 %v1849
        %2104 = vmatprep.subr.mxu0 %v1842
        %2105 = vmatpush2.msra.mxu0 %v1841
        %2106 = vmatprep.subr.mxu0 %v1834
        %2107 = vmatpush2.msra.mxu0 %v1833
        %2108 = vmatprep.subr.mxu0 %v1826
        %2109 = vmatpush2.msra.mxu0 %v1825
        %2110 = vmatprep.subr.mxu0 %v1818
        %2111 = vmatpush2.msra.mxu0 %v1817
        %2112 = vmatprep.subr.mxu0 %v1810
        %2113 = vmatpush2.msra.mxu0 %v1809
        %2114 = vmatprep.mubr.f32.mxu0 %v1424
        %2115 = vmatmul.mubr.f32.gmra.mxu0 %v1423
        %v2116 = vpop.f32.mrf.mxu0
        %v2117 = vadd.f32 %v2046, %v2116
        %v2118 = vpop.f32.mrf.mxu0
        %v2119 = vadd.f32 %v2048, %v2118
        %2120 = vdwg.mxu0
        %2121 = vmatprep.subr.mxu0 %v1548
        %2122 = vmatpush1.msra.mxu0 %v1547
        %2123 = vmatprep.subr.mxu0 %v1540
        %2124 = vmatpush1.msra.mxu0 %v1539
        %2125 = vmatprep.subr.mxu0 %v1532
        %2126 = vmatpush1.msra.mxu0 %v1531
        %2127 = vmatprep.subr.mxu0 %v1524
        %2128 = vmatpush1.msra.mxu0 %v1523
        %2129 = vmatprep.subr.mxu0 %v1516
        %2130 = vmatpush1.msra.mxu0 %v1515
        %2131 = vmatprep.subr.mxu0 %v1508
        %2132 = vmatpush1.msra.mxu0 %v1507
        %2133 = vmatprep.subr.mxu0 %v1500
        %2134 = vmatpush1.msra.mxu0 %v1499
        %2135 = vmatprep.subr.mxu0 %v1492
        %2136 = vmatpush1.msra.mxu0 %v1491
        %2137 = vmatprep.subr.mxu0 %v1484
        %2138 = vmatpush1.msra.mxu0 %v1483
        %2139 = vmatprep.subr.mxu0 %v1476
        %2140 = vmatpush1.msra.mxu0 %v1475
        %2141 = vmatprep.subr.mxu0 %v1468
        %2142 = vmatpush1.msra.mxu0 %v1467
        %2143 = vmatprep.subr.mxu0 %v1460
        %2144 = vmatpush1.msra.mxu0 %v1459
        %2145 = vmatprep.subr.mxu0 %v1452
        %2146 = vmatpush1.msra.mxu0 %v1451
        %2147 = vmatprep.subr.mxu0 %v1444
        %2148 = vmatpush1.msra.mxu0 %v1443
        %2149 = vmatprep.subr.mxu0 %v1436
        %2150 = vmatpush1.msra.mxu0 %v1435
        %2151 = vmatprep.subr.mxu0 %v1428
        %2152 = vmatpush1.msra.mxu0 %v1427
        %2153 = vmatprep.subr.mxu0 %v1676
        %2154 = vmatpush2.msra.mxu0 %v1675
        %2155 = vmatprep.subr.mxu0 %v1668
        %2156 = vmatpush2.msra.mxu0 %v1667
        %2157 = vmatprep.subr.mxu0 %v1660
        %2158 = vmatpush2.msra.mxu0 %v1659
        %2159 = vmatprep.subr.mxu0 %v1652
        %2160 = vmatpush2.msra.mxu0 %v1651
        %2161 = vmatprep.subr.mxu0 %v1644
        %2162 = vmatpush2.msra.mxu0 %v1643
        %2163 = vmatprep.subr.mxu0 %v1636
        %2164 = vmatpush2.msra.mxu0 %v1635
        %2165 = vmatprep.subr.mxu0 %v1628
        %2166 = vmatpush2.msra.mxu0 %v1627
        %2167 = vmatprep.subr.mxu0 %v1620
        %2168 = vmatpush2.msra.mxu0 %v1619
        %2169 = vmatprep.subr.mxu0 %v1612
        %2170 = vmatpush2.msra.mxu0 %v1611
        %2171 = vmatprep.subr.mxu0 %v1604
        %2172 = vmatpush2.msra.mxu0 %v1603
        %2173 = vmatprep.subr.mxu0 %v1596
        %2174 = vmatpush2.msra.mxu0 %v1595
        %2175 = vmatprep.subr.mxu0 %v1588
        %2176 = vmatpush2.msra.mxu0 %v1587
        %2177 = vmatprep.subr.mxu0 %v1580
        %2178 = vmatpush2.msra.mxu0 %v1579
        %2179 = vmatprep.subr.mxu0 %v1572
        %2180 = vmatpush2.msra.mxu0 %v1571
        %2181 = vmatprep.subr.mxu0 %v1564
        %2182 = vmatpush2.msra.mxu0 %v1563
        %2183 = vmatprep.subr.mxu0 %v1556
        %2184 = vmatpush2.msra.mxu0 %v1555
        %2185 = vmatprep.mubr.f32.mxu0 %v1422
        %2186 = vmatmul.mubr.f32.gmra.mxu0 %v1421
        %v2187 = vpop.f32.mrf.mxu0
        %v2188 = vadd.f32 %v1950, %v2187
        %v2189 = vpop.f32.mrf.mxu0
        %v2190 = vadd.f32 %v1954, %v2189
        %2191 = vdwg.mxu0
        %2192 = vmatprep.subr.mxu0 %v1804
        %2193 = vmatpush1.msra.mxu0 %v1803
        %2194 = vmatprep.subr.mxu0 %v1796
        %2195 = vmatpush1.msra.mxu0 %v1795
        %2196 = vmatprep.subr.mxu0 %v1788
        %2197 = vmatpush1.msra.mxu0 %v1787
        %2198 = vmatprep.subr.mxu0 %v1780
        %2199 = vmatpush1.msra.mxu0 %v1779
        %2200 = vmatprep.subr.mxu0 %v1772
        %2201 = vmatpush1.msra.mxu0 %v1771
        %2202 = vmatprep.subr.mxu0 %v1764
        %2203 = vmatpush1.msra.mxu0 %v1763
        %2204 = vmatprep.subr.mxu0 %v1756
        %2205 = vmatpush1.msra.mxu0 %v1755
        %2206 = vmatprep.subr.mxu0 %v1748
        %2207 = vmatpush1.msra.mxu0 %v1747
        %2208 = vmatprep.subr.mxu0 %v1740
        %2209 = vmatpush1.msra.mxu0 %v1739
        %2210 = vmatprep.subr.mxu0 %v1732
        %2211 = vmatpush1.msra.mxu0 %v1731
        %2212 = vmatprep.subr.mxu0 %v1724
        %2213 = vmatpush1.msra.mxu0 %v1723
        %2214 = vmatprep.subr.mxu0 %v1716
        %2215 = vmatpush1.msra.mxu0 %v1715
        %2216 = vmatprep.subr.mxu0 %v1708
        %2217 = vmatpush1.msra.mxu0 %v1707
        %2218 = vmatprep.subr.mxu0 %v1700
        %2219 = vmatpush1.msra.mxu0 %v1699
        %2220 = vmatprep.subr.mxu0 %v1692
        %2221 = vmatpush1.msra.mxu0 %v1691
        %2222 = vmatprep.subr.mxu0 %v1684
        %2223 = vmatpush1.msra.mxu0 %v1683
        %2224 = vmatprep.subr.mxu0 %v1932
        %2225 = vmatpush2.msra.mxu0 %v1931
        %2226 = vmatprep.subr.mxu0 %v1924
        %2227 = vmatpush2.msra.mxu0 %v1923
        %2228 = vmatprep.subr.mxu0 %v1916
        %2229 = vmatpush2.msra.mxu0 %v1915
        %2230 = vmatprep.subr.mxu0 %v1908
        %2231 = vmatpush2.msra.mxu0 %v1907
        %2232 = vmatprep.subr.mxu0 %v1900
        %2233 = vmatpush2.msra.mxu0 %v1899
        %2234 = vmatprep.subr.mxu0 %v1892
        %2235 = vmatpush2.msra.mxu0 %v1891
        %2236 = vmatprep.subr.mxu0 %v1884
        %2237 = vmatpush2.msra.mxu0 %v1883
        %2238 = vmatprep.subr.mxu0 %v1876
        %2239 = vmatpush2.msra.mxu0 %v1875
        %2240 = vmatprep.subr.mxu0 %v1868
        %2241 = vmatpush2.msra.mxu0 %v1867
        %2242 = vmatprep.subr.mxu0 %v1860
        %2243 = vmatpush2.msra.mxu0 %v1859
        %2244 = vmatprep.subr.mxu0 %v1852
        %2245 = vmatpush2.msra.mxu0 %v1851
        %2246 = vmatprep.subr.mxu0 %v1844
        %2247 = vmatpush2.msra.mxu0 %v1843
        %2248 = vmatprep.subr.mxu0 %v1836
        %2249 = vmatpush2.msra.mxu0 %v1835
        %2250 = vmatprep.subr.mxu0 %v1828
        %2251 = vmatpush2.msra.mxu0 %v1827
        %2252 = vmatprep.subr.mxu0 %v1820
        %2253 = vmatpush2.msra.mxu0 %v1819
        %2254 = vmatprep.subr.mxu0 %v1812
        %2255 = vmatpush2.msra.mxu0 %v1811
        %2256 = vmatprep.mubr.f32.mxu0 %v1424
        %2257 = vmatmul.mubr.f32.gmra.mxu0 %v1423
        %v2258 = vpop.f32.mrf.mxu0
        %v2259 = vadd.f32 %v2188, %v2258
        %v2260 = vpop.f32.mrf.mxu0
        %v2261 = vadd.f32 %v2190, %v2260
        %2262 = vdwg.mxu0
        %2263 = vmatprep.subr.mxu0 %v1550
        %2264 = vmatpush1.msra.mxu0 %v1549
        %2265 = vmatprep.subr.mxu0 %v1542
        %2266 = vmatpush1.msra.mxu0 %v1541
        %2267 = vmatprep.subr.mxu0 %v1534
        %2268 = vmatpush1.msra.mxu0 %v1533
        %2269 = vmatprep.subr.mxu0 %v1526
        %2270 = vmatpush1.msra.mxu0 %v1525
        %2271 = vmatprep.subr.mxu0 %v1518
        %2272 = vmatpush1.msra.mxu0 %v1517
        %2273 = vmatprep.subr.mxu0 %v1510
        %2274 = vmatpush1.msra.mxu0 %v1509
        %2275 = vmatprep.subr.mxu0 %v1502
        %2276 = vmatpush1.msra.mxu0 %v1501
        %2277 = vmatprep.subr.mxu0 %v1494
        %2278 = vmatpush1.msra.mxu0 %v1493
        %2279 = vmatprep.subr.mxu0 %v1486
        %2280 = vmatpush1.msra.mxu0 %v1485
        %2281 = vmatprep.subr.mxu0 %v1478
        %2282 = vmatpush1.msra.mxu0 %v1477
        %2283 = vmatprep.subr.mxu0 %v1470
        %2284 = vmatpush1.msra.mxu0 %v1469
        %2285 = vmatprep.subr.mxu0 %v1462
        %2286 = vmatpush1.msra.mxu0 %v1461
        %2287 = vmatprep.subr.mxu0 %v1454
        %2288 = vmatpush1.msra.mxu0 %v1453
        %2289 = vmatprep.subr.mxu0 %v1446
        %2290 = vmatpush1.msra.mxu0 %v1445
        %2291 = vmatprep.subr.mxu0 %v1438
        %2292 = vmatpush1.msra.mxu0 %v1437
        %2293 = vmatprep.subr.mxu0 %v1430
        %2294 = vmatpush1.msra.mxu0 %v1429
        %2295 = vmatprep.subr.mxu0 %v1678
        %2296 = vmatpush2.msra.mxu0 %v1677
        %2297 = vmatprep.subr.mxu0 %v1670
        %2298 = vmatpush2.msra.mxu0 %v1669
        %2299 = vmatprep.subr.mxu0 %v1662
        %2300 = vmatpush2.msra.mxu0 %v1661
        %2301 = vmatprep.subr.mxu0 %v1654
        %2302 = vmatpush2.msra.mxu0 %v1653
        %2303 = vmatprep.subr.mxu0 %v1646
        %2304 = vmatpush2.msra.mxu0 %v1645
        %2305 = vmatprep.subr.mxu0 %v1638
        %2306 = vmatpush2.msra.mxu0 %v1637
        %2307 = vmatprep.subr.mxu0 %v1630
        %2308 = vmatpush2.msra.mxu0 %v1629
        %2309 = vmatprep.subr.mxu0 %v1622
        %2310 = vmatpush2.msra.mxu0 %v1621
        %2311 = vmatprep.subr.mxu0 %v1614
        %2312 = vmatpush2.msra.mxu0 %v1613
        %2313 = vmatprep.subr.mxu0 %v1606
        %2314 = vmatpush2.msra.mxu0 %v1605
        %2315 = vmatprep.subr.mxu0 %v1598
        %2316 = vmatpush2.msra.mxu0 %v1597
        %2317 = vmatprep.subr.mxu0 %v1590
        %2318 = vmatpush2.msra.mxu0 %v1589
        %2319 = vmatprep.subr.mxu0 %v1582
        %2320 = vmatpush2.msra.mxu0 %v1581
        %2321 = vmatprep.subr.mxu0 %v1574
        %2322 = vmatpush2.msra.mxu0 %v1573
        %2323 = vmatprep.subr.mxu0 %v1566
        %2324 = vmatpush2.msra.mxu0 %v1565
        %2325 = vmatprep.subr.mxu0 %v1558
        %2326 = vmatpush2.msra.mxu0 %v1557
        %2327 = vmatprep.mubr.f32.mxu0 %v1422
        %2328 = vmatmul.mubr.f32.gmra.mxu0 %v1421
        %v2329 = vpop.f32.mrf.mxu0
        %v2330 = vadd.f32 %v1958, %v2329
        %v2331 = vpop.f32.mrf.mxu0
        %v2332 = vadd.f32 %v1962, %v2331
        %2333 = vdwg.mxu0
        %2334 = vmatprep.subr.mxu0 %v1806
        %2335 = vmatpush1.msra.mxu0 %v1805
        %2336 = vmatprep.subr.mxu0 %v1798
        %2337 = vmatpush1.msra.mxu0 %v1797
        %2338 = vmatprep.subr.mxu0 %v1790
        %2339 = vmatpush1.msra.mxu0 %v1789
        %2340 = vmatprep.subr.mxu0 %v1782
        %2341 = vmatpush1.msra.mxu0 %v1781
        %2342 = vmatprep.subr.mxu0 %v1774
        %2343 = vmatpush1.msra.mxu0 %v1773
        %2344 = vmatprep.subr.mxu0 %v1766
        %2345 = vmatpush1.msra.mxu0 %v1765
        %2346 = vmatprep.subr.mxu0 %v1758
        %2347 = vmatpush1.msra.mxu0 %v1757
        %2348 = vmatprep.subr.mxu0 %v1750
        %2349 = vmatpush1.msra.mxu0 %v1749
        %2350 = vmatprep.subr.mxu0 %v1742
        %2351 = vmatpush1.msra.mxu0 %v1741
        %2352 = vmatprep.subr.mxu0 %v1734
        %2353 = vmatpush1.msra.mxu0 %v1733
        %2354 = vmatprep.subr.mxu0 %v1726
        %2355 = vmatpush1.msra.mxu0 %v1725
        %2356 = vmatprep.subr.mxu0 %v1718
        %2357 = vmatpush1.msra.mxu0 %v1717
        %2358 = vmatprep.subr.mxu0 %v1710
        %2359 = vmatpush1.msra.mxu0 %v1709
        %2360 = vmatprep.subr.mxu0 %v1702
        %2361 = vmatpush1.msra.mxu0 %v1701
        %2362 = vmatprep.subr.mxu0 %v1694
        %2363 = vmatpush1.msra.mxu0 %v1693
        %2364 = vmatprep.subr.mxu0 %v1686
        %2365 = vmatpush1.msra.mxu0 %v1685
        %2366 = vmatprep.subr.mxu0 %v1934
        %2367 = vmatpush2.msra.mxu0 %v1933
        %2368 = vmatprep.subr.mxu0 %v1926
        %2369 = vmatpush2.msra.mxu0 %v1925
        %2370 = vmatprep.subr.mxu0 %v1918
        %2371 = vmatpush2.msra.mxu0 %v1917
        %2372 = vmatprep.subr.mxu0 %v1910
        %2373 = vmatpush2.msra.mxu0 %v1909
        %2374 = vmatprep.subr.mxu0 %v1902
        %2375 = vmatpush2.msra.mxu0 %v1901
        %2376 = vmatprep.subr.mxu0 %v1894
        %2377 = vmatpush2.msra.mxu0 %v1893
        %2378 = vmatprep.subr.mxu0 %v1886
        %2379 = vmatpush2.msra.mxu0 %v1885
        %2380 = vmatprep.subr.mxu0 %v1878
        %2381 = vmatpush2.msra.mxu0 %v1877
        %2382 = vmatprep.subr.mxu0 %v1870
        %2383 = vmatpush2.msra.mxu0 %v1869
        %2384 = vmatprep.subr.mxu0 %v1862
        %2385 = vmatpush2.msra.mxu0 %v1861
        %2386 = vmatprep.subr.mxu0 %v1854
        %2387 = vmatpush2.msra.mxu0 %v1853
        %2388 = vmatprep.subr.mxu0 %v1846
        %2389 = vmatpush2.msra.mxu0 %v1845
        %2390 = vmatprep.subr.mxu0 %v1838
        %2391 = vmatpush2.msra.mxu0 %v1837
        %2392 = vmatprep.subr.mxu0 %v1830
        %2393 = vmatpush2.msra.mxu0 %v1829
        %2394 = vmatprep.subr.mxu0 %v1822
        %2395 = vmatpush2.msra.mxu0 %v1821
        %2396 = vmatprep.subr.mxu0 %v1814
        %2397 = vmatpush2.msra.mxu0 %v1813
        %2398 = vmatprep.mubr.f32.mxu0 %v1424
        %2399 = vmatmul.mubr.f32.gmra.mxu0 %v1423
        %v2400 = vpop.f32.mrf.mxu0
        %v2401 = vadd.f32 %v2330, %v2400
        %v2402 = vpop.f32.mrf.mxu0
        %v2403 = vadd.f32 %v2332, %v2402
        %2404 = vdwg.mxu0
        %2405 = vmatprep.subr.mxu0 %v1552
        %2406 = vmatpush1.msra.mxu0 %v1551
        %2407 = vmatprep.subr.mxu0 %v1544
        %2408 = vmatpush1.msra.mxu0 %v1543
        %2409 = vmatprep.subr.mxu0 %v1536
        %2410 = vmatpush1.msra.mxu0 %v1535
        %2411 = vmatprep.subr.mxu0 %v1528
        %2412 = vmatpush1.msra.mxu0 %v1527
        %2413 = vmatprep.subr.mxu0 %v1520
        %2414 = vmatpush1.msra.mxu0 %v1519
        %2415 = vmatprep.subr.mxu0 %v1512
        %2416 = vmatpush1.msra.mxu0 %v1511
        %2417 = vmatprep.subr.mxu0 %v1504
        %2418 = vmatpush1.msra.mxu0 %v1503
        %2419 = vmatprep.subr.mxu0 %v1496
        %2420 = vmatpush1.msra.mxu0 %v1495
        %2421 = vmatprep.subr.mxu0 %v1488
        %2422 = vmatpush1.msra.mxu0 %v1487
        %2423 = vmatprep.subr.mxu0 %v1480
        %2424 = vmatpush1.msra.mxu0 %v1479
        %2425 = vmatprep.subr.mxu0 %v1472
        %2426 = vmatpush1.msra.mxu0 %v1471
        %2427 = vmatprep.subr.mxu0 %v1464
        %2428 = vmatpush1.msra.mxu0 %v1463
        %2429 = vmatprep.subr.mxu0 %v1456
        %2430 = vmatpush1.msra.mxu0 %v1455
        %2431 = vmatprep.subr.mxu0 %v1448
        %2432 = vmatpush1.msra.mxu0 %v1447
        %2433 = vmatprep.subr.mxu0 %v1440
        %2434 = vmatpush1.msra.mxu0 %v1439
        %2435 = vmatprep.subr.mxu0 %v1432
        %2436 = vmatpush1.msra.mxu0 %v1431
        %2437 = vmatprep.subr.mxu0 %v1680
        %2438 = vmatpush2.msra.mxu0 %v1679
        %2439 = vmatprep.subr.mxu0 %v1672
        %2440 = vmatpush2.msra.mxu0 %v1671
        %2441 = vmatprep.subr.mxu0 %v1664
        %2442 = vmatpush2.msra.mxu0 %v1663
        %2443 = vmatprep.subr.mxu0 %v1656
        %2444 = vmatpush2.msra.mxu0 %v1655
        %2445 = vmatprep.subr.mxu0 %v1648
        %2446 = vmatpush2.msra.mxu0 %v1647
        %2447 = vmatprep.subr.mxu0 %v1640
        %2448 = vmatpush2.msra.mxu0 %v1639
        %2449 = vmatprep.subr.mxu0 %v1632
        %2450 = vmatpush2.msra.mxu0 %v1631
        %2451 = vmatprep.subr.mxu0 %v1624
        %2452 = vmatpush2.msra.mxu0 %v1623
        %2453 = vmatprep.subr.mxu0 %v1616
        %2454 = vmatpush2.msra.mxu0 %v1615
        %2455 = vmatprep.subr.mxu0 %v1608
        %2456 = vmatpush2.msra.mxu0 %v1607
        %2457 = vmatprep.subr.mxu0 %v1600
        %2458 = vmatpush2.msra.mxu0 %v1599
        %2459 = vmatprep.subr.mxu0 %v1592
        %2460 = vmatpush2.msra.mxu0 %v1591
        %2461 = vmatprep.subr.mxu0 %v1584
        %2462 = vmatpush2.msra.mxu0 %v1583
        %2463 = vmatprep.subr.mxu0 %v1576
        %2464 = vmatpush2.msra.mxu0 %v1575
        %2465 = vmatprep.subr.mxu0 %v1568
        %2466 = vmatpush2.msra.mxu0 %v1567
        %2467 = vmatprep.subr.mxu0 %v1560
        %2468 = vmatpush2.msra.mxu0 %v1559
        %2469 = vmatprep.mubr.f32.mxu0 %v1422
        %2470 = vmatmul.mubr.f32.gmra.mxu0 %v1421
        %v2471 = vpop.f32.mrf.mxu0
        %v2472 = vadd.f32 %v1966, %v2471
        %v2473 = vpop.f32.mrf.mxu0
        %v2474 = vadd.f32 %v1970, %v2473
        %2475 = vdwg.mxu0
        %2476 = vmatprep.subr.mxu0 %v1808
        %2477 = vmatpush1.msra.mxu0 %v1807
        %2478 = vmatprep.subr.mxu0 %v1800
        %2479 = vmatpush1.msra.mxu0 %v1799
        %2480 = vmatprep.subr.mxu0 %v1792
        %2481 = vmatpush1.msra.mxu0 %v1791
        %2482 = vmatprep.subr.mxu0 %v1784
        %2483 = vmatpush1.msra.mxu0 %v1783
        %2484 = vmatprep.subr.mxu0 %v1776
        %2485 = vmatpush1.msra.mxu0 %v1775
        %2486 = vmatprep.subr.mxu0 %v1768
        %2487 = vmatpush1.msra.mxu0 %v1767
        %2488 = vmatprep.subr.mxu0 %v1760
        %2489 = vmatpush1.msra.mxu0 %v1759
        %2490 = vmatprep.subr.mxu0 %v1752
        %2491 = vmatpush1.msra.mxu0 %v1751
        %2492 = vmatprep.subr.mxu0 %v1744
        %2493 = vmatpush1.msra.mxu0 %v1743
        %2494 = vmatprep.subr.mxu0 %v1736
        %2495 = vmatpush1.msra.mxu0 %v1735
        %2496 = vmatprep.subr.mxu0 %v1728
        %2497 = vmatpush1.msra.mxu0 %v1727
        %2498 = vmatprep.subr.mxu0 %v1720
        %2499 = vmatpush1.msra.mxu0 %v1719
        %2500 = vmatprep.subr.mxu0 %v1712
        %2501 = vmatpush1.msra.mxu0 %v1711
        %2502 = vmatprep.subr.mxu0 %v1704
        %2503 = vmatpush1.msra.mxu0 %v1703
        %2504 = vmatprep.subr.mxu0 %v1696
        %2505 = vmatpush1.msra.mxu0 %v1695
        %2506 = vmatprep.subr.mxu0 %v1688
        %2507 = vmatpush1.msra.mxu0 %v1687
        %2508 = vmatprep.subr.mxu0 %v1936
        %2509 = vmatpush2.msra.mxu0 %v1935
        %2510 = vmatprep.subr.mxu0 %v1928
        %2511 = vmatpush2.msra.mxu0 %v1927
        %2512 = vmatprep.subr.mxu0 %v1920
        %2513 = vmatpush2.msra.mxu0 %v1919
        %2514 = vmatprep.subr.mxu0 %v1912
        %2515 = vmatpush2.msra.mxu0 %v1911
        %2516 = vmatprep.subr.mxu0 %v1904
        %2517 = vmatpush2.msra.mxu0 %v1903
        %2518 = vmatprep.subr.mxu0 %v1896
        %2519 = vmatpush2.msra.mxu0 %v1895
        %2520 = vmatprep.subr.mxu0 %v1888
        %2521 = vmatpush2.msra.mxu0 %v1887
        %2522 = vmatprep.subr.mxu0 %v1880
        %2523 = vmatpush2.msra.mxu0 %v1879
        %2524 = vmatprep.subr.mxu0 %v1872
        %2525 = vmatpush2.msra.mxu0 %v1871
        %2526 = vmatprep.subr.mxu0 %v1864
        %2527 = vmatpush2.msra.mxu0 %v1863
        %2528 = vmatprep.subr.mxu0 %v1856
        %2529 = vmatpush2.msra.mxu0 %v1855
        %2530 = vmatprep.subr.mxu0 %v1848
        %2531 = vmatpush2.msra.mxu0 %v1847
        %2532 = vmatprep.subr.mxu0 %v1840
        %2533 = vmatpush2.msra.mxu0 %v1839
        %2534 = vmatprep.subr.mxu0 %v1832
        %2535 = vmatpush2.msra.mxu0 %v1831
        %2536 = vmatprep.subr.mxu0 %v1824
        %2537 = vmatpush2.msra.mxu0 %v1823
        %2538 = vmatprep.subr.mxu0 %v1816
        %2539 = vmatpush2.msra.mxu0 %v1815
        %2540 = vmatprep.mubr.f32.mxu0 %v1424
        %2541 = vmatmul.mubr.f32.gmra.mxu0 %v1423
        %v2542 = vpop.f32.mrf.mxu0
        %v2543 = vadd.f32 %v2472, %v2542
        %v2544 = vpop.f32.mrf.mxu0
        %v2545 = vadd.f32 %v2474, %v2544
        %2546 = vdwg.mxu0
        %2547 = vst [vmem:[%s294] sm:$0xff] %v2117
        %2548 = vst [vmem:[%s294 + $0x8] sm:$0xff] %v2119
        %2549 = vst [vmem:[%s294 + $0x10] sm:$0xff] %v2259
        %2550 = vst [vmem:[%s294 + $0x18] sm:$0xff] %v2261
        %2551 = vst [vmem:[%s294 + $0x20] sm:$0xff] %v2401
        %2552 = vst [vmem:[%s294 + $0x28] sm:$0xff] %v2403
        %2553 = vst [vmem:[%s294 + $0x30] sm:$0xff] %v2543
        %2554 = vst [vmem:[%s294 + $0x38] sm:$0xff] %v2545
        %s2555 = sand.u32 %s142, 1
        %s2556 = scalar_lea.sflag [#allocation4], %s2555
        %s2557 = sand.u32 %s142, 1
        %s2558 = smul.addr %s2557, 64
        %s2559 = scalar_lea.vmem [#allocation11], %s2558
        // Predicated region
        $region61: #{tpu_custom_call.1} parent=39 // pred_check
          %p2560 = pneg %p152
        $region62: #{tpu_custom_call.1} parent=39 // pred_check_branch
          %2562 = sbr.rel (%p2560) target = $region64
        $region63: #{tpu_custom_call.1} parent=39 // pred_region
          %s2564 = ssub.s32 1024, 1024
          %2565 = vsyncadd %s2556, %s2564
          %s2566 = smul.addr %s24, 8
          %s2567 = smul.addr %s2566, 128
          %s2568 = scalar_lea.hbm %s5, %s2567
          %s2570 = sshll.u32 %s2559, 4
          %s2571 = int_to_ptr.vmem [resolvable:$true] %s2570
          %2573 = dma.vmem_to_hbm [thread:$0]  %s2571, 1024, %s2568, %s2556
        $region64: #{tpu_custom_call.1} parent=39 // pred_fallthru
          _
      $region40: #{tpu_custom_call.1} parent=5 // pred_fallthru
        _
      %p2574 = scmp.le.s32.totalorder 2, %s19
      // Predicated region
      $region65: #{tpu_custom_call.1} parent=5 // pred_check
        %p2575 = pneg %p2574
      $region66: #{tpu_custom_call.1} parent=5 // pred_check_branch
        %2577 = sbr.rel (%p2575) target = $region68
      $region67: #{tpu_custom_call.1} parent=5 // pred_region
        %s2578 = ssub.s32 %s19, 2
        // Predicated region
        $region69: #{tpu_custom_call.1} parent=67 // pred_check
          %p2579 = pneg %p158
        $region70: #{tpu_custom_call.1} parent=67 // pred_check_branch
          %2581 = sbr.rel (%p2579) target = $region72
        $region71: #{tpu_custom_call.1} parent=67 // pred_region
          %s2582 = sand.u32 %s143, 1
          %s2583 = scalar_lea.sflag [#allocation4], %s2582
          %s2584 = sand.u32 %s143, 1
          %s2585 = smul.addr %s2584, 64
          %s2586 = scalar_lea.vmem [#allocation11], %s2585
          %2587 = dma.done %s2583, 1024
        $region72: #{tpu_custom_call.1} parent=67 // pred_fallthru
          _
      $region68: #{tpu_custom_call.1} parent=5 // pred_fallthru
        _
    $region6: #{tpu_custom_call.1} parent=1 // loop_footer
      %s23 = sadd.s32 1, %s19
    $region7: #{tpu_custom_call.1} parent=1 // loop_footer_branch
      %18 = sbr.rel target = $region3
    $region8: #{tpu_custom_call.1} parent=1 // loop_exit
      _
    %2588 = vsyncpa [#allocation3], 1
    %s2589 = scalar_lea.sflag [#allocation3], 1
    %2590 = vsyncpa %s2589, 1
    %2591 = vsyncpa [#allocation6], 1
    %2592 = vsyncpa [#allocation9], 1
    %2593 = vsyncpa [#allocation4], 1
    %s2594 = scalar_lea.sflag [#allocation4], 1
    %2595 = vsyncpa %s2594, 1

</llo_original>
